<compile_context>
chip_gen: v7x
topology: tpu7x:2x2x1
jax: 0.10.0
libtpu: 0.0.40
codegen_flags: <defaults>
</compile_context>

<pallas_src>
import functools

import jax
import jax.numpy as jnp
from jax import lax
from jax.experimental import pallas as pl
from jax.experimental.pallas import tpu as pltpu


# ----------------------------------------------------------------------------
# Fused kernel: one invocation computes the entire residual attention block.
# ----------------------------------------------------------------------------

def _residual_attention_block_kernel(
        x_ref, ln1g_ref, ln1b_ref, wqkv_ref, bqkv_ref, wo_ref, bo_ref,
        ln2g_ref, ln2b_ref, w1_ref, b1_ref, w2_ref, b2_ref, *rest,
        batch, seq, n_head, eps, has_mask):
    if has_mask:
        mask_ref, o_ref = rest
    else:
        (o_ref,) = rest

    M, D = x_ref.shape                      # M = batch * seq
    H = n_head
    hd = D // H
    scale = float(hd) ** -0.5

    x = x_ref[...].astype(jnp.float32)      # residual stream, (M, D)

    # ---------------- LayerNorm 1 (fp32, eps=1e-5) ----------------
    mu = jnp.mean(x, axis=-1, keepdims=True)
    var = jnp.mean(jnp.square(x - mu), axis=-1, keepdims=True)
    xn = (x - mu) * lax.rsqrt(var + eps)
    xn = xn * ln1g_ref[...] + ln1b_ref[...]

    # ---------------- fused QKV projection (single MXU matmul) ----------------
    qkv = jnp.dot(xn, wqkv_ref[...],
                  preferred_element_type=jnp.float32) + bqkv_ref[...]   # (M, 3D)

    # ---------------- multi-head attention ----------------
    # All batches of a head in one batched contraction (no per-(b,h) grid).
    head_outs = []
    for h in range(H):
        qh = (qkv[:, h * hd:(h + 1) * hd]
              .reshape(batch, seq, hd)) * scale
        kh = (qkv[:, D + h * hd:D + (h + 1) * hd]
              .reshape(batch, seq, hd))
        vh = (qkv[:, 2 * D + h * hd:2 * D + (h + 1) * hd]
              .reshape(batch, seq, hd))
        s = jnp.einsum('nqd,nkd->nqk', qh, kh,
                       preferred_element_type=jnp.float32)              # (N, L, L)
        if has_mask:
            s = s + mask_ref[...][None, :, :]
        m = jnp.max(s, axis=-1, keepdims=True)
        p = jnp.exp(s - m)
        p = p / jnp.sum(p, axis=-1, keepdims=True)
        head_outs.append(jnp.einsum('nqk,nkd->nqd', p, vh,
                                    preferred_element_type=jnp.float32))
    attn = jnp.concatenate(head_outs, axis=-1).reshape(M, D)

    # ---------------- output projection + residual ----------------
    x = x + jnp.dot(attn, wo_ref[...],
                    preferred_element_type=jnp.float32) + bo_ref[...]

    # ---------------- LayerNorm 2 ----------------
    mu2 = jnp.mean(x, axis=-1, keepdims=True)
    var2 = jnp.mean(jnp.square(x - mu2), axis=-1, keepdims=True)
    xn2 = (x - mu2) * lax.rsqrt(var2 + eps)
    xn2 = xn2 * ln2g_ref[...] + ln2b_ref[...]

    # ---------------- MLP: c_fc -> QuickGELU -> c_proj, + residual ----------------
    h1 = jnp.dot(xn2, w1_ref[...],
                 preferred_element_type=jnp.float32) + b1_ref[...]      # (M, 4D)
    h1 = h1 * (1.0 / (1.0 + jnp.exp(-1.702 * h1)))                      # QuickGELU
    x = x + jnp.dot(h1, w2_ref[...],
                    preferred_element_type=jnp.float32) + b2_ref[...]

    o_ref[...] = x.astype(o_ref.dtype)


# ----------------------------------------------------------------------------
# Wrapper (layout plumbing only; all math is in the fused kernel above)
# ----------------------------------------------------------------------------

def residual_attention_block(x, params, n_head, attn_mask=None):
    """x: (L, N, D) — same (seq, batch, embed) layout torch's module receives."""
    L, N, D = x.shape
    assert D % n_head == 0
    f32 = jnp.float32
    M = N * L

    # batch-major, flattened tokens for the kernel
    x2d = jnp.transpose(x, (1, 0, 2)).reshape(M, D).astype(f32)

    def row(v):
        return v.reshape(1, -1).astype(f32)

    ins = [
        x2d,
        row(params["ln1_g"]), row(params["ln1_b"]),
        params["in_proj_w"].T.astype(f32),       # (D, 3D)
        row(params["in_proj_b"]),
        params["out_proj_w"].T.astype(f32),      # (D, D)
        row(params["out_proj_b"]),
        row(params["ln2_g"]), row(params["ln2_b"]),
        params["c_fc_w"].T.astype(f32),          # (D, 4D)
        row(params["c_fc_b"]),
        params["c_proj_w"].T.astype(f32),        # (4D, D)
        row(params["c_proj_b"]),
    ]
    has_mask = attn_mask is not None
    if has_mask:
        ins.append(attn_mask.astype(f32))        # additive (L, L) mask

    in_specs = [pl.BlockSpec(a.shape, (lambda i, nd=a.ndim: (0,) * nd))
                for a in ins]

    out = pl.pallas_call(
        functools.partial(_residual_attention_block_kernel,
                          batch=N, seq=L, n_head=n_head, eps=1e-5,
                          has_mask=has_mask),
        out_shape=jax.ShapeDtypeStruct((M, D), f32),
        grid_spec=pltpu.PrefetchScalarGridSpec(
            num_scalar_prefetch=0,
            grid=(1,),
            in_specs=in_specs,
            out_specs=pl.BlockSpec((M, D), lambda i: (0, 0)),
        ),
        compiler_params=pltpu.CompilerParams(
            dimension_semantics=("arbitrary",)),
    )(*ins)

    return jnp.transpose(out.reshape(N, L, D), (1, 0, 2)).astype(x.dtype)


# ----------------------------------------------------------------------------
# Pure-JAX reference (mirrors the torch module) for a correctness check
# ----------------------------------------------------------------------------

def _reference(x, p, n_head, attn_mask=None):
    L, N, D = x.shape
    hd = D // n_head

    def ln(v, g, b):
        mu = jnp.mean(v, -1, keepdims=True)
        var = jnp.mean(jnp.square(v - mu), -1, keepdims=True)
        return (v - mu) / jnp.sqrt(var + 1e-5) * g + b

    xn = ln(x, p["ln1_g"], p["ln1_b"])
    qkv = xn @ p["in_proj_w"].T + p["in_proj_b"]
    q, k, v = jnp.split(qkv, 3, axis=-1)

    def split_heads(t):                          # (L, N, D) -> (N, H, L, hd)
        return t.reshape(L, N, n_head, hd).transpose(1, 2, 0, 3)

    q, k, v = map(split_heads, (q, k, v))
    s = jnp.einsum('nhqd,nhkd->nhqk', q, k) / jnp.sqrt(hd)
    if attn_mask is not None:
        s = s + attn_mask
    pattn = jax.nn.softmax(s, axis=-1)
    o = jnp.einsum('nhqk,nhkd->nhqd', pattn, v)
    o = o.transpose(2, 0, 1, 3).reshape(L, N, D)
    x = x + o @ p["out_proj_w"].T + p["out_proj_b"]

    xn2 = ln(x, p["ln2_g"], p["ln2_b"])
    h = xn2 @ p["c_fc_w"].T + p["c_fc_b"]
    h = h * jax.nn.sigmoid(1.702 * h)            # QuickGELU
    return x + h @ p["c_proj_w"].T + p["c_proj_b"]


# ----------------------------------------------------------------------------

if __name__ == "__main__":
    d_model, n_head, L, N = 64, 4, 8, 2          # (seq, batch) = (8, 2)

    key = jax.random.PRNGKey(0)
    ks = iter(jax.random.split(key, 16))

    def nrm(shape, s=0.05):
        return (s * jax.random.normal(next(ks), shape)).astype(jnp.float32)

    params = {
        "ln1_g": 1.0 + nrm((d_model,)), "ln1_b": nrm((d_model,)),
        "in_proj_w": nrm((3 * d_model, d_model)),
        "in_proj_b": nrm((3 * d_model,)),
        "out_proj_w": nrm((d_model, d_model)), "out_proj_b": nrm((d_model,)),
        "ln2_g": 1.0 + nrm((d_model,)), "ln2_b": nrm((d_model,)),
        "c_fc_w": nrm((4 * d_model, d_model)), "c_fc_b": nrm((4 * d_model,)),
        "c_proj_w": nrm((d_model, 4 * d_model)), "c_proj_b": nrm((d_model,)),
    }

    x = jax.random.normal(next(ks), (L, N, d_model), dtype=jnp.float32)

    out = residual_attention_block(x, params, n_head, attn_mask=None)
    jax.block_until_ready(out)

    ref = _reference(x, params, n_head, attn_mask=None)

    assert out.shape == (L, N, d_model) and out.dtype == jnp.float32
    assert bool(jnp.all(jnp.isfinite(out)))
    max_err = float(jnp.max(jnp.abs(out - ref)))
    assert bool(jnp.allclose(out, ref, atol=2e-2, rtol=2e-2)), max_err
    print("KERNEL_OK")
</pallas_src>

<mosaic_0001>
module attributes {stable_mosaic.version = 11 : i64} {
  func.func @_residual_attention_block_kernel(%arg0: i32, %arg1: memref<16x64xf32, #tpu.memory_space<vmem>>, %arg2: memref<1x64xf32, #tpu.memory_space<vmem>>, %arg3: memref<1x64xf32, #tpu.memory_space<vmem>>, %arg4: memref<64x192xf32, #tpu.memory_space<vmem>>, %arg5: memref<1x192xf32, #tpu.memory_space<vmem>>, %arg6: memref<64x64xf32, #tpu.memory_space<vmem>>, %arg7: memref<1x64xf32, #tpu.memory_space<vmem>>, %arg8: memref<1x64xf32, #tpu.memory_space<vmem>>, %arg9: memref<1x64xf32, #tpu.memory_space<vmem>>, %arg10: memref<64x256xf32, #tpu.memory_space<vmem>>, %arg11: memref<1x256xf32, #tpu.memory_space<vmem>>, %arg12: memref<256x64xf32, #tpu.memory_space<vmem>>, %arg13: memref<1x64xf32, #tpu.memory_space<vmem>>, %arg14: memref<16x64xf32, #tpu.memory_space<vmem>>) attributes {dimension_semantics = [#tpu.dimension_semantics<arbitrary>], iteration_bounds = array<i64: 1>, scalar_prefetch = 0 : i64, scratch_operands = 0 : i64, tpu.core_type = #tpu.core_type<tc>, window_params = [{pipeline_mode = #tpu.pipeline_mode<synchronous>, transform_indices = @transform_0, window_bounds = array<i64: 16, 64>}, {pipeline_mode = #tpu.pipeline_mode<synchronous>, transform_indices = @transform_1, window_bounds = array<i64: 1, 64>}, {pipeline_mode = #tpu.pipeline_mode<synchronous>, transform_indices = @transform_2, window_bounds = array<i64: 1, 64>}, {pipeline_mode = #tpu.pipeline_mode<synchronous>, transform_indices = @transform_3, window_bounds = array<i64: 64, 192>}, {pipeline_mode = #tpu.pipeline_mode<synchronous>, transform_indices = @transform_4, window_bounds = array<i64: 1, 192>}, {pipeline_mode = #tpu.pipeline_mode<synchronous>, transform_indices = @transform_5, window_bounds = array<i64: 64, 64>}, {pipeline_mode = #tpu.pipeline_mode<synchronous>, transform_indices = @transform_6, window_bounds = array<i64: 1, 64>}, {pipeline_mode = #tpu.pipeline_mode<synchronous>, transform_indices = @transform_7, window_bounds = array<i64: 1, 64>}, {pipeline_mode = #tpu.pipeline_mode<synchronous>, transform_indices = @transform_8, window_bounds = array<i64: 1, 64>}, {pipeline_mode = #tpu.pipeline_mode<synchronous>, transform_indices = @transform_9, window_bounds = array<i64: 64, 256>}, {pipeline_mode = #tpu.pipeline_mode<synchronous>, transform_indices = @transform_10, window_bounds = array<i64: 1, 256>}, {pipeline_mode = #tpu.pipeline_mode<synchronous>, transform_indices = @transform_11, window_bounds = array<i64: 256, 64>}, {pipeline_mode = #tpu.pipeline_mode<synchronous>, transform_indices = @transform_12, window_bounds = array<i64: 1, 64>}, {pipeline_mode = #tpu.pipeline_mode<synchronous>, transform_indices = @transform_13, window_bounds = array<i64: 16, 64>}]} {
    %c0 = arith.constant 0 : index
    %c0_0 = arith.constant 0 : index
    %0 = vector.load %arg1[%c0, %c0_0] : memref<16x64xf32, #tpu.memory_space<vmem>>, vector<16x64xf32>
    %cst = arith.constant dense<0.000000e+00> : vector<16xf32>
    %1 = vector.multi_reduction <add>, %0, %cst [1] : vector<16x64xf32> to vector<16xf32>
    %2 = vector.shape_cast %1 : vector<16xf32> to vector<16x1xf32>
    %cst_1 = arith.constant 6.400000e+01 : f32
    %3 = vector.broadcast %cst_1 : f32 to vector<16x1xf32>
    %4 = arith.divf %2, %3 : vector<16x1xf32>
    %5 = vector.broadcast %4 : vector<16x1xf32> to vector<16x64xf32>
    %6 = arith.subf %0, %5 : vector<16x64xf32>
    %7 = arith.mulf %6, %6 : vector<16x64xf32>
    %cst_2 = arith.constant dense<0.000000e+00> : vector<16xf32>
    %8 = vector.multi_reduction <add>, %7, %cst_2 [1] : vector<16x64xf32> to vector<16xf32>
    %9 = vector.shape_cast %8 : vector<16xf32> to vector<16x1xf32>
    %cst_3 = arith.constant 6.400000e+01 : f32
    %10 = vector.broadcast %cst_3 : f32 to vector<16x1xf32>
    %11 = arith.divf %9, %10 : vector<16x1xf32>
    %12 = vector.broadcast %4 : vector<16x1xf32> to vector<16x64xf32>
    %13 = arith.subf %0, %12 : vector<16x64xf32>
    %cst_4 = arith.constant 9.99999974E-6 : f32
    %14 = vector.broadcast %cst_4 : f32 to vector<16x1xf32>
    %15 = arith.addf %11, %14 : vector<16x1xf32>
    %16 = math.rsqrt %15 : vector<16x1xf32>
    %17 = vector.broadcast %16 : vector<16x1xf32> to vector<16x64xf32>
    %18 = arith.mulf %13, %17 : vector<16x64xf32>
    %c0_5 = arith.constant 0 : index
    %c0_6 = arith.constant 0 : index
    %19 = vector.load %arg2[%c0_5, %c0_6] : memref<1x64xf32, #tpu.memory_space<vmem>>, vector<1x64xf32>
    %20 = vector.broadcast %19 : vector<1x64xf32> to vector<16x64xf32>
    %21 = arith.mulf %18, %20 : vector<16x64xf32>
    %c0_7 = arith.constant 0 : index
    %c0_8 = arith.constant 0 : index
    %22 = vector.load %arg3[%c0_7, %c0_8] : memref<1x64xf32, #tpu.memory_space<vmem>>, vector<1x64xf32>
    %23 = vector.broadcast %22 : vector<1x64xf32> to vector<16x64xf32>
    %24 = arith.addf %21, %23 : vector<16x64xf32>
    %c0_9 = arith.constant 0 : index
    %c0_10 = arith.constant 0 : index
    %25 = vector.load %arg4[%c0_9, %c0_10] : memref<64x192xf32, #tpu.memory_space<vmem>>, vector<64x192xf32>
    %cst_11 = arith.constant dense<0.000000e+00> : vector<16x192xf32>
    %26 = tpu.matmul %24, %25, %cst_11 {dimension_numbers = #tpu.dot_dimension_numbers<[1], [0], [0], [1], [0, 0, 1, 1], [], []>} : vector<16x64xf32>, vector<64x192xf32>, vector<16x192xf32> -> vector<16x192xf32>
    %c0_12 = arith.constant 0 : index
    %c0_13 = arith.constant 0 : index
    %27 = vector.load %arg5[%c0_12, %c0_13] : memref<1x192xf32, #tpu.memory_space<vmem>>, vector<1x192xf32>
    %28 = vector.broadcast %27 : vector<1x192xf32> to vector<16x192xf32>
    %29 = arith.addf %26, %28 : vector<16x192xf32>
    %30 = vector.extract_strided_slice %29 {offsets = [0, 0], sizes = [16, 16], strides = [1, 1]} : vector<16x192xf32> to vector<16x16xf32>
    %31 = vector.shape_cast %30 : vector<16x16xf32> to vector<2x8x16xf32>
    %cst_14 = arith.constant 2.500000e-01 : f32
    %32 = vector.broadcast %cst_14 : f32 to vector<2x8x16xf32>
    %33 = arith.mulf %31, %32 : vector<2x8x16xf32>
    %34 = vector.extract_strided_slice %29 {offsets = [0, 64], sizes = [16, 16], strides = [1, 1]} : vector<16x192xf32> to vector<16x16xf32>
    %35 = vector.shape_cast %34 : vector<16x16xf32> to vector<2x8x16xf32>
    %36 = vector.extract_strided_slice %29 {offsets = [0, 128], sizes = [16, 16], strides = [1, 1]} : vector<16x192xf32> to vector<16x16xf32>
    %37 = vector.shape_cast %36 : vector<16x16xf32> to vector<2x8x16xf32>
    "tpu.trace_start"() <{level = 10 : i32, message = "nqd,nkd->nqk"}> : () -> ()
    %cst_15 = arith.constant dense<0.000000e+00> : vector<2x8x8xf32>
    %38 = tpu.matmul %33, %35, %cst_15 {dimension_numbers = #tpu.dot_dimension_numbers<[2], [2], [1], [1], [0, 0, 0, 1, 1, 1], [0], [0]>} : vector<2x8x16xf32>, vector<2x8x16xf32>, vector<2x8x8xf32> -> vector<2x8x8xf32>
    "tpu.trace_stop"() : () -> ()
    %cst_16 = arith.constant dense<0xFF800000> : vector<2x8xf32>
    %39 = vector.multi_reduction <maximumf>, %38, %cst_16 [2] : vector<2x8x8xf32> to vector<2x8xf32>
    %40 = vector.shape_cast %39 : vector<2x8xf32> to vector<2x8x1xf32>
    %41 = vector.broadcast %40 : vector<2x8x1xf32> to vector<2x8x8xf32>
    %42 = arith.subf %38, %41 : vector<2x8x8xf32>
    %43 = math.exp %42 : vector<2x8x8xf32>
    %cst_17 = arith.constant dense<0.000000e+00> : vector<2x8xf32>
    %44 = vector.multi_reduction <add>, %43, %cst_17 [2] : vector<2x8x8xf32> to vector<2x8xf32>
    %45 = vector.shape_cast %44 : vector<2x8xf32> to vector<2x8x1xf32>
    %46 = vector.broadcast %45 : vector<2x8x1xf32> to vector<2x8x8xf32>
    %47 = arith.divf %43, %46 : vector<2x8x8xf32>
    "tpu.trace_start"() <{level = 10 : i32, message = "nqk,nkd->nqd"}> : () -> ()
    %cst_18 = arith.constant dense<0.000000e+00> : vector<2x8x16xf32>
    %48 = tpu.matmul %47, %37, %cst_18 {dimension_numbers = #tpu.dot_dimension_numbers<[2], [1], [1], [2], [0, 0, 0, 1, 1, 2], [0], [0]>} : vector<2x8x8xf32>, vector<2x8x16xf32>, vector<2x8x16xf32> -> vector<2x8x16xf32>
    "tpu.trace_stop"() : () -> ()
    %49 = vector.extract_strided_slice %29 {offsets = [0, 16], sizes = [16, 16], strides = [1, 1]} : vector<16x192xf32> to vector<16x16xf32>
    %50 = vector.shape_cast %49 : vector<16x16xf32> to vector<2x8x16xf32>
    %cst_19 = arith.constant 2.500000e-01 : f32
    %51 = vector.broadcast %cst_19 : f32 to vector<2x8x16xf32>
    %52 = arith.mulf %50, %51 : vector<2x8x16xf32>
    %53 = vector.extract_strided_slice %29 {offsets = [0, 80], sizes = [16, 16], strides = [1, 1]} : vector<16x192xf32> to vector<16x16xf32>
    %54 = vector.shape_cast %53 : vector<16x16xf32> to vector<2x8x16xf32>
    %55 = vector.extract_strided_slice %29 {offsets = [0, 144], sizes = [16, 16], strides = [1, 1]} : vector<16x192xf32> to vector<16x16xf32>
    %56 = vector.shape_cast %55 : vector<16x16xf32> to vector<2x8x16xf32>
    "tpu.trace_start"() <{level = 10 : i32, message = "nqd,nkd->nqk"}> : () -> ()
    %cst_20 = arith.constant dense<0.000000e+00> : vector<2x8x8xf32>
    %57 = tpu.matmul %52, %54, %cst_20 {dimension_numbers = #tpu.dot_dimension_numbers<[2], [2], [1], [1], [0, 0, 0, 1, 1, 1], [0], [0]>} : vector<2x8x16xf32>, vector<2x8x16xf32>, vector<2x8x8xf32> -> vector<2x8x8xf32>
    "tpu.trace_stop"() : () -> ()
    %cst_21 = arith.constant dense<0xFF800000> : vector<2x8xf32>
    %58 = vector.multi_reduction <maximumf>, %57, %cst_21 [2] : vector<2x8x8xf32> to vector<2x8xf32>
    %59 = vector.shape_cast %58 : vector<2x8xf32> to vector<2x8x1xf32>
    %60 = vector.broadcast %59 : vector<2x8x1xf32> to vector<2x8x8xf32>
    %61 = arith.subf %57, %60 : vector<2x8x8xf32>
    %62 = math.exp %61 : vector<2x8x8xf32>
    %cst_22 = arith.constant dense<0.000000e+00> : vector<2x8xf32>
    %63 = vector.multi_reduction <add>, %62, %cst_22 [2] : vector<2x8x8xf32> to vector<2x8xf32>
    %64 = vector.shape_cast %63 : vector<2x8xf32> to vector<2x8x1xf32>
    %65 = vector.broadcast %64 : vector<2x8x1xf32> to vector<2x8x8xf32>
    %66 = arith.divf %62, %65 : vector<2x8x8xf32>
    "tpu.trace_start"() <{level = 10 : i32, message = "nqk,nkd->nqd"}> : () -> ()
    %cst_23 = arith.constant dense<0.000000e+00> : vector<2x8x16xf32>
    %67 = tpu.matmul %66, %56, %cst_23 {dimension_numbers = #tpu.dot_dimension_numbers<[2], [1], [1], [2], [0, 0, 0, 1, 1, 2], [0], [0]>} : vector<2x8x8xf32>, vector<2x8x16xf32>, vector<2x8x16xf32> -> vector<2x8x16xf32>
    "tpu.trace_stop"() : () -> ()
    %68 = vector.extract_strided_slice %29 {offsets = [0, 32], sizes = [16, 16], strides = [1, 1]} : vector<16x192xf32> to vector<16x16xf32>
    %69 = vector.shape_cast %68 : vector<16x16xf32> to vector<2x8x16xf32>
    %cst_24 = arith.constant 2.500000e-01 : f32
    %70 = vector.broadcast %cst_24 : f32 to vector<2x8x16xf32>
    %71 = arith.mulf %69, %70 : vector<2x8x16xf32>
    %72 = vector.extract_strided_slice %29 {offsets = [0, 96], sizes = [16, 16], strides = [1, 1]} : vector<16x192xf32> to vector<16x16xf32>
    %73 = vector.shape_cast %72 : vector<16x16xf32> to vector<2x8x16xf32>
    %74 = vector.extract_strided_slice %29 {offsets = [0, 160], sizes = [16, 16], strides = [1, 1]} : vector<16x192xf32> to vector<16x16xf32>
    %75 = vector.shape_cast %74 : vector<16x16xf32> to vector<2x8x16xf32>
    "tpu.trace_start"() <{level = 10 : i32, message = "nqd,nkd->nqk"}> : () -> ()
    %cst_25 = arith.constant dense<0.000000e+00> : vector<2x8x8xf32>
    %76 = tpu.matmul %71, %73, %cst_25 {dimension_numbers = #tpu.dot_dimension_numbers<[2], [2], [1], [1], [0, 0, 0, 1, 1, 1], [0], [0]>} : vector<2x8x16xf32>, vector<2x8x16xf32>, vector<2x8x8xf32> -> vector<2x8x8xf32>
    "tpu.trace_stop"() : () -> ()
    %cst_26 = arith.constant dense<0xFF800000> : vector<2x8xf32>
    %77 = vector.multi_reduction <maximumf>, %76, %cst_26 [2] : vector<2x8x8xf32> to vector<2x8xf32>
    %78 = vector.shape_cast %77 : vector<2x8xf32> to vector<2x8x1xf32>
    %79 = vector.broadcast %78 : vector<2x8x1xf32> to vector<2x8x8xf32>
    %80 = arith.subf %76, %79 : vector<2x8x8xf32>
    %81 = math.exp %80 : vector<2x8x8xf32>
    %cst_27 = arith.constant dense<0.000000e+00> : vector<2x8xf32>
    %82 = vector.multi_reduction <add>, %81, %cst_27 [2] : vector<2x8x8xf32> to vector<2x8xf32>
    %83 = vector.shape_cast %82 : vector<2x8xf32> to vector<2x8x1xf32>
    %84 = vector.broadcast %83 : vector<2x8x1xf32> to vector<2x8x8xf32>
    %85 = arith.divf %81, %84 : vector<2x8x8xf32>
    "tpu.trace_start"() <{level = 10 : i32, message = "nqk,nkd->nqd"}> : () -> ()
    %cst_28 = arith.constant dense<0.000000e+00> : vector<2x8x16xf32>
    %86 = tpu.matmul %85, %75, %cst_28 {dimension_numbers = #tpu.dot_dimension_numbers<[2], [1], [1], [2], [0, 0, 0, 1, 1, 2], [0], [0]>} : vector<2x8x8xf32>, vector<2x8x16xf32>, vector<2x8x16xf32> -> vector<2x8x16xf32>
    "tpu.trace_stop"() : () -> ()
    %87 = vector.extract_strided_slice %29 {offsets = [0, 48], sizes = [16, 16], strides = [1, 1]} : vector<16x192xf32> to vector<16x16xf32>
    %88 = vector.shape_cast %87 : vector<16x16xf32> to vector<2x8x16xf32>
    %cst_29 = arith.constant 2.500000e-01 : f32
    %89 = vector.broadcast %cst_29 : f32 to vector<2x8x16xf32>
    %90 = arith.mulf %88, %89 : vector<2x8x16xf32>
    %91 = vector.extract_strided_slice %29 {offsets = [0, 112], sizes = [16, 16], strides = [1, 1]} : vector<16x192xf32> to vector<16x16xf32>
    %92 = vector.shape_cast %91 : vector<16x16xf32> to vector<2x8x16xf32>
    %93 = vector.extract_strided_slice %29 {offsets = [0, 176], sizes = [16, 16], strides = [1, 1]} : vector<16x192xf32> to vector<16x16xf32>
    %94 = vector.shape_cast %93 : vector<16x16xf32> to vector<2x8x16xf32>
    "tpu.trace_start"() <{level = 10 : i32, message = "nqd,nkd->nqk"}> : () -> ()
    %cst_30 = arith.constant dense<0.000000e+00> : vector<2x8x8xf32>
    %95 = tpu.matmul %90, %92, %cst_30 {dimension_numbers = #tpu.dot_dimension_numbers<[2], [2], [1], [1], [0, 0, 0, 1, 1, 1], [0], [0]>} : vector<2x8x16xf32>, vector<2x8x16xf32>, vector<2x8x8xf32> -> vector<2x8x8xf32>
    "tpu.trace_stop"() : () -> ()
    %cst_31 = arith.constant dense<0xFF800000> : vector<2x8xf32>
    %96 = vector.multi_reduction <maximumf>, %95, %cst_31 [2] : vector<2x8x8xf32> to vector<2x8xf32>
    %97 = vector.shape_cast %96 : vector<2x8xf32> to vector<2x8x1xf32>
    %98 = vector.broadcast %97 : vector<2x8x1xf32> to vector<2x8x8xf32>
    %99 = arith.subf %95, %98 : vector<2x8x8xf32>
    %100 = math.exp %99 : vector<2x8x8xf32>
    %cst_32 = arith.constant dense<0.000000e+00> : vector<2x8xf32>
    %101 = vector.multi_reduction <add>, %100, %cst_32 [2] : vector<2x8x8xf32> to vector<2x8xf32>
    %102 = vector.shape_cast %101 : vector<2x8xf32> to vector<2x8x1xf32>
    %103 = vector.broadcast %102 : vector<2x8x1xf32> to vector<2x8x8xf32>
    %104 = arith.divf %100, %103 : vector<2x8x8xf32>
    "tpu.trace_start"() <{level = 10 : i32, message = "nqk,nkd->nqd"}> : () -> ()
    %cst_33 = arith.constant dense<0.000000e+00> : vector<2x8x16xf32>
    %105 = tpu.matmul %104, %94, %cst_33 {dimension_numbers = #tpu.dot_dimension_numbers<[2], [1], [1], [2], [0, 0, 0, 1, 1, 2], [0], [0]>} : vector<2x8x8xf32>, vector<2x8x16xf32>, vector<2x8x16xf32> -> vector<2x8x16xf32>
    "tpu.trace_stop"() : () -> ()
    %106 = tpu.concatenate %48, %67, %86, %105 in 2 : vector<2x8x16xf32>, vector<2x8x16xf32>, vector<2x8x16xf32>, vector<2x8x16xf32> -> vector<2x8x64xf32>
    %107 = vector.shape_cast %106 : vector<2x8x64xf32> to vector<16x64xf32>
    %c0_34 = arith.constant 0 : index
    %c0_35 = arith.constant 0 : index
    %108 = vector.load %arg6[%c0_34, %c0_35] : memref<64x64xf32, #tpu.memory_space<vmem>>, vector<64x64xf32>
    %cst_36 = arith.constant dense<0.000000e+00> : vector<16x64xf32>
    %109 = tpu.matmul %107, %108, %cst_36 {dimension_numbers = #tpu.dot_dimension_numbers<[1], [0], [0], [1], [0, 0, 1, 1], [], []>} : vector<16x64xf32>, vector<64x64xf32>, vector<16x64xf32> -> vector<16x64xf32>
    %110 = arith.addf %0, %109 : vector<16x64xf32>
    %c0_37 = arith.constant 0 : index
    %c0_38 = arith.constant 0 : index
    %111 = vector.load %arg7[%c0_37, %c0_38] : memref<1x64xf32, #tpu.memory_space<vmem>>, vector<1x64xf32>
    %112 = vector.broadcast %111 : vector<1x64xf32> to vector<16x64xf32>
    %113 = arith.addf %110, %112 : vector<16x64xf32>
    %cst_39 = arith.constant dense<0.000000e+00> : vector<16xf32>
    %114 = vector.multi_reduction <add>, %113, %cst_39 [1] : vector<16x64xf32> to vector<16xf32>
    %115 = vector.shape_cast %114 : vector<16xf32> to vector<16x1xf32>
    %cst_40 = arith.constant 6.400000e+01 : f32
    %116 = vector.broadcast %cst_40 : f32 to vector<16x1xf32>
    %117 = arith.divf %115, %116 : vector<16x1xf32>
    %118 = vector.broadcast %117 : vector<16x1xf32> to vector<16x64xf32>
    %119 = arith.subf %113, %118 : vector<16x64xf32>
    %120 = arith.mulf %119, %119 : vector<16x64xf32>
    %cst_41 = arith.constant dense<0.000000e+00> : vector<16xf32>
    %121 = vector.multi_reduction <add>, %120, %cst_41 [1] : vector<16x64xf32> to vector<16xf32>
    %122 = vector.shape_cast %121 : vector<16xf32> to vector<16x1xf32>
    %cst_42 = arith.constant 6.400000e+01 : f32
    %123 = vector.broadcast %cst_42 : f32 to vector<16x1xf32>
    %124 = arith.divf %122, %123 : vector<16x1xf32>
    %125 = vector.broadcast %117 : vector<16x1xf32> to vector<16x64xf32>
    %126 = arith.subf %113, %125 : vector<16x64xf32>
    %cst_43 = arith.constant 9.99999974E-6 : f32
    %127 = vector.broadcast %cst_43 : f32 to vector<16x1xf32>
    %128 = arith.addf %124, %127 : vector<16x1xf32>
    %129 = math.rsqrt %128 : vector<16x1xf32>
    %130 = vector.broadcast %129 : vector<16x1xf32> to vector<16x64xf32>
    %131 = arith.mulf %126, %130 : vector<16x64xf32>
    %c0_44 = arith.constant 0 : index
    %c0_45 = arith.constant 0 : index
    %132 = vector.load %arg8[%c0_44, %c0_45] : memref<1x64xf32, #tpu.memory_space<vmem>>, vector<1x64xf32>
    %133 = vector.broadcast %132 : vector<1x64xf32> to vector<16x64xf32>
    %134 = arith.mulf %131, %133 : vector<16x64xf32>
    %c0_46 = arith.constant 0 : index
    %c0_47 = arith.constant 0 : index
    %135 = vector.load %arg9[%c0_46, %c0_47] : memref<1x64xf32, #tpu.memory_space<vmem>>, vector<1x64xf32>
    %136 = vector.broadcast %135 : vector<1x64xf32> to vector<16x64xf32>
    %137 = arith.addf %134, %136 : vector<16x64xf32>
    %c0_48 = arith.constant 0 : index
    %c0_49 = arith.constant 0 : index
    %138 = vector.load %arg10[%c0_48, %c0_49] : memref<64x256xf32, #tpu.memory_space<vmem>>, vector<64x256xf32>
    %cst_50 = arith.constant dense<0.000000e+00> : vector<16x256xf32>
    %139 = tpu.matmul %137, %138, %cst_50 {dimension_numbers = #tpu.dot_dimension_numbers<[1], [0], [0], [1], [0, 0, 1, 1], [], []>} : vector<16x64xf32>, vector<64x256xf32>, vector<16x256xf32> -> vector<16x256xf32>
    %c0_51 = arith.constant 0 : index
    %c0_52 = arith.constant 0 : index
    %140 = vector.load %arg11[%c0_51, %c0_52] : memref<1x256xf32, #tpu.memory_space<vmem>>, vector<1x256xf32>
    %141 = vector.broadcast %140 : vector<1x256xf32> to vector<16x256xf32>
    %142 = arith.addf %139, %141 : vector<16x256xf32>
    %cst_53 = arith.constant -1.702000e+00 : f32
    %143 = vector.broadcast %cst_53 : f32 to vector<16x256xf32>
    %144 = arith.mulf %143, %142 : vector<16x256xf32>
    %145 = math.exp %144 : vector<16x256xf32>
    %cst_54 = arith.constant 1.000000e+00 : f32
    %146 = vector.broadcast %cst_54 : f32 to vector<16x256xf32>
    %147 = arith.addf %146, %145 : vector<16x256xf32>
    %cst_55 = arith.constant 1.000000e+00 : f32
    %148 = vector.broadcast %cst_55 : f32 to vector<16x256xf32>
    %149 = arith.divf %148, %147 : vector<16x256xf32>
    %150 = arith.mulf %142, %149 : vector<16x256xf32>
    %c0_56 = arith.constant 0 : index
    %c0_57 = arith.constant 0 : index
    %151 = vector.load %arg12[%c0_56, %c0_57] : memref<256x64xf32, #tpu.memory_space<vmem>>, vector<256x64xf32>
    %cst_58 = arith.constant dense<0.000000e+00> : vector<16x64xf32>
    %152 = tpu.matmul %150, %151, %cst_58 {dimension_numbers = #tpu.dot_dimension_numbers<[1], [0], [0], [1], [0, 0, 1, 1], [], []>} : vector<16x256xf32>, vector<256x64xf32>, vector<16x64xf32> -> vector<16x64xf32>
    %153 = arith.addf %113, %152 : vector<16x64xf32>
    %c0_59 = arith.constant 0 : index
    %c0_60 = arith.constant 0 : index
    %154 = vector.load %arg13[%c0_59, %c0_60] : memref<1x64xf32, #tpu.memory_space<vmem>>, vector<1x64xf32>
    %155 = vector.broadcast %154 : vector<1x64xf32> to vector<16x64xf32>
    %156 = arith.addf %153, %155 : vector<16x64xf32>
    %c0_61 = arith.constant 0 : index
    %c0_62 = arith.constant 0 : index
    %157 = vector.load %arg14[%c0_61, %c0_62] : memref<16x64xf32, #tpu.memory_space<vmem>>, vector<16x64xf32>
    tpu.vector_store %arg14[%c0_61, %c0_62], %156 {strides = array<i32>} : memref<16x64xf32, #tpu.memory_space<vmem>>, vector<16x64xf32>,
    return
  }
  func.func @transform_0(%arg0: i32) -> (i32, i32) {
    %c0_i32 = arith.constant 0 : i32
    %c0_i32_0 = arith.constant 0 : i32
    %c0_i32_1 = arith.constant 0 : i32
    return %c0_i32, %c0_i32_0 : i32, i32
  }
  func.func @transform_1(%arg0: i32) -> (i32, i32) {
    %c0_i32 = arith.constant 0 : i32
    %c0_i32_0 = arith.constant 0 : i32
    %c0_i32_1 = arith.constant 0 : i32
    return %c0_i32, %c0_i32_0 : i32, i32
  }
  func.func @transform_2(%arg0: i32) -> (i32, i32) {
    %c0_i32 = arith.constant 0 : i32
    %c0_i32_0 = arith.constant 0 : i32
    %c0_i32_1 = arith.constant 0 : i32
    return %c0_i32, %c0_i32_0 : i32, i32
  }
  func.func @transform_3(%arg0: i32) -> (i32, i32) {
    %c0_i32 = arith.constant 0 : i32
    %c0_i32_0 = arith.constant 0 : i32
    %c0_i32_1 = arith.constant 0 : i32
    return %c0_i32, %c0_i32_0 : i32, i32
  }
  func.func @transform_4(%arg0: i32) -> (i32, i32) {
    %c0_i32 = arith.constant 0 : i32
    %c0_i32_0 = arith.constant 0 : i32
    %c0_i32_1 = arith.constant 0 : i32
    return %c0_i32, %c0_i32_0 : i32, i32
  }
  func.func @transform_5(%arg0: i32) -> (i32, i32) {
    %c0_i32 = arith.constant 0 : i32
    %c0_i32_0 = arith.constant 0 : i32
    %c0_i32_1 = arith.constant 0 : i32
    return %c0_i32, %c0_i32_0 : i32, i32
  }
  func.func @transform_6(%arg0: i32) -> (i32, i32) {
    %c0_i32 = arith.constant 0 : i32
    %c0_i32_0 = arith.constant 0 : i32
    %c0_i32_1 = arith.constant 0 : i32
    return %c0_i32, %c0_i32_0 : i32, i32
  }
  func.func @transform_7(%arg0: i32) -> (i32, i32) {
    %c0_i32 = arith.constant 0 : i32
    %c0_i32_0 = arith.constant 0 : i32
    %c0_i32_1 = arith.constant 0 : i32
    return %c0_i32, %c0_i32_0 : i32, i32
  }
  func.func @transform_8(%arg0: i32) -> (i32, i32) {
    %c0_i32 = arith.constant 0 : i32
    %c0_i32_0 = arith.constant 0 : i32
    %c0_i32_1 = arith.constant 0 : i32
    return %c0_i32, %c0_i32_0 : i32, i32
  }
  func.func @transform_9(%arg0: i32) -> (i32, i32) {
    %c0_i32 = arith.constant 0 : i32
    %c0_i32_0 = arith.constant 0 : i32
    %c0_i32_1 = arith.constant 0 : i32
    return %c0_i32, %c0_i32_0 : i32, i32
  }
  func.func @transform_10(%arg0: i32) -> (i32, i32) {
    %c0_i32 = arith.constant 0 : i32
    %c0_i32_0 = arith.constant 0 : i32
    %c0_i32_1 = arith.constant 0 : i32
    return %c0_i32, %c0_i32_0 : i32, i32
  }
  func.func @transform_11(%arg0: i32) -> (i32, i32) {
    %c0_i32 = arith.constant 0 : i32
    %c0_i32_0 = arith.constant 0 : i32
    %c0_i32_1 = arith.constant 0 : i32
    return %c0_i32, %c0_i32_0 : i32, i32
  }
  func.func @transform_12(%arg0: i32) -> (i32, i32) {
    %c0_i32 = arith.constant 0 : i32
    %c0_i32_0 = arith.constant 0 : i32
    %c0_i32_1 = arith.constant 0 : i32
    return %c0_i32, %c0_i32_0 : i32, i32
  }
  func.func @transform_13(%arg0: i32) -> (i32, i32) {
    %c0_i32 = arith.constant 0 : i32
    %c0_i32_0 = arith.constant 0 : i32
    %c0_i32_1 = arith.constant 0 : i32
    return %c0_i32, %c0_i32_0 : i32, i32
  }
}

</mosaic_0001>

<llo_original>
// kernel: tpu_custom_call.1
$region0: #{tpu_custom_call.1}
  #allocation0 [shape = 'u32[]', space=smem, size = 0x4, offset = 0x4, fixed_abs, tag = 'smem constant byte address 0x4 - core index']
  #allocation1 [shape = 'u32[144,128]{1,0:T(1,128)}', space=vmem, size = 0x12000, scoped, tag = 'internal scratch']
  %s0 = inlined_call_operand.vmem [shape: f32[16,64], index: 0, kind: input, shape index: {}]
  %s1 = inlined_call_operand.vmem [shape: f32[1,64], index: 1, kind: input, shape index: {}]
  %s2 = inlined_call_operand.vmem [shape: f32[1,64], index: 2, kind: input, shape index: {}]
  %s3 = inlined_call_operand.vmem [shape: f32[64,192], index: 3, kind: input, shape index: {}]
  %s4 = inlined_call_operand.vmem [shape: f32[1,192], index: 4, kind: input, shape index: {}]
  %s5 = inlined_call_operand.vmem [shape: f32[64,64], index: 5, kind: input, shape index: {}]
  %s6 = inlined_call_operand.vmem [shape: f32[1,64], index: 6, kind: input, shape index: {}]
  %s7 = inlined_call_operand.vmem [shape: f32[1,64], index: 7, kind: input, shape index: {}]
  %s8 = inlined_call_operand.vmem [shape: f32[1,64], index: 8, kind: input, shape index: {}]
  %s9 = inlined_call_operand.vmem [shape: f32[64,256], index: 9, kind: input, shape index: {}]
  %s10 = inlined_call_operand.vmem [shape: f32[1,256], index: 10, kind: input, shape index: {}]
  %s11 = inlined_call_operand.vmem [shape: f32[256,64], index: 11, kind: input, shape index: {}]
  %s12 = inlined_call_operand.vmem [shape: f32[1,64], index: 12, kind: input, shape index: {}]
  %s13 = inlined_call_operand.hbm [shape: f32[16,64], index: 13, kind: output, shape index: {}]
  %s14 = sld [smem:[#allocation0]]
  $region62: #{tpu_custom_call.1} parent=0
    _
  %s16 = ssub.s32 1, %s14
  %s17 = scalar_select 0, %s16, %s14
  $region1: #{tpu_custom_call.1} parent=0
    #allocation2 [shape = 'u8[8192]{0}', space=vmem, size = 0x2000, scoped, tag = 'output window, operand 0, single buffered']
    #allocation3 [shape = 's32[1]{0}', space=sflag, size = 0x4, scoped, tag = 'scoped memory for tpu_custom_call.1']
    %18 = vsyncpa [#allocation3], 0
    // Predicated region
    $region2: #{tpu_custom_call.1} parent=1 // pred_check
      _
    $region3: #{tpu_custom_call.1} parent=1 // pred_check_branch
      %20 = sbr.rel (0) target = $region5
    $region4: #{tpu_custom_call.1} parent=1 // pred_region
      _
    $region5: #{tpu_custom_call.1} parent=1 // pred_fallthru
      _
    // Predicated region
    $region6: #{tpu_custom_call.1} parent=1 // pred_check
      _
    $region7: #{tpu_custom_call.1} parent=1 // pred_check_branch
      %22 = sbr.rel (0) target = $region9
    $region8: #{tpu_custom_call.1} parent=1 // pred_region
      _
    $region9: #{tpu_custom_call.1} parent=1 // pred_fallthru
      _
    // Predicated region
    $region10: #{tpu_custom_call.1} parent=1 // pred_check
      _
    $region11: #{tpu_custom_call.1} parent=1 // pred_check_branch
      %24 = sbr.rel (0) target = $region13
    $region12: #{tpu_custom_call.1} parent=1 // pred_region
      _
    $region13: #{tpu_custom_call.1} parent=1 // pred_fallthru
      _
    // Predicated region
    $region14: #{tpu_custom_call.1} parent=1 // pred_check
      _
    $region15: #{tpu_custom_call.1} parent=1 // pred_check_branch
      %26 = sbr.rel (0) target = $region17
    $region16: #{tpu_custom_call.1} parent=1 // pred_region
      _
    $region17: #{tpu_custom_call.1} parent=1 // pred_fallthru
      _
    // Predicated region
    $region18: #{tpu_custom_call.1} parent=1 // pred_check
      _
    $region19: #{tpu_custom_call.1} parent=1 // pred_check_branch
      %28 = sbr.rel (0) target = $region21
    $region20: #{tpu_custom_call.1} parent=1 // pred_region
      _
    $region21: #{tpu_custom_call.1} parent=1 // pred_fallthru
      _
    // Predicated region
    $region22: #{tpu_custom_call.1} parent=1 // pred_check
      _
    $region23: #{tpu_custom_call.1} parent=1 // pred_check_branch
      %30 = sbr.rel (0) target = $region25
    $region24: #{tpu_custom_call.1} parent=1 // pred_region
      _
    $region25: #{tpu_custom_call.1} parent=1 // pred_fallthru
      _
    // Predicated region
    $region26: #{tpu_custom_call.1} parent=1 // pred_check
      _
    $region27: #{tpu_custom_call.1} parent=1 // pred_check_branch
      %32 = sbr.rel (0) target = $region29
    $region28: #{tpu_custom_call.1} parent=1 // pred_region
      _
    $region29: #{tpu_custom_call.1} parent=1 // pred_fallthru
      _
    // Predicated region
    $region30: #{tpu_custom_call.1} parent=1 // pred_check
      _
    $region31: #{tpu_custom_call.1} parent=1 // pred_check_branch
      %34 = sbr.rel (0) target = $region33
    $region32: #{tpu_custom_call.1} parent=1 // pred_region
      _
    $region33: #{tpu_custom_call.1} parent=1 // pred_fallthru
      _
    // Predicated region
    $region34: #{tpu_custom_call.1} parent=1 // pred_check
      _
    $region35: #{tpu_custom_call.1} parent=1 // pred_check_branch
      %36 = sbr.rel (0) target = $region37
    $region36: #{tpu_custom_call.1} parent=1 // pred_region
      _
    $region37: #{tpu_custom_call.1} parent=1 // pred_fallthru
      _
    // Predicated region
    $region38: #{tpu_custom_call.1} parent=1 // pred_check
      _
    $region39: #{tpu_custom_call.1} parent=1 // pred_check_branch
      %38 = sbr.rel (0) target = $region41
    $region40: #{tpu_custom_call.1} parent=1 // pred_region
      _
    $region41: #{tpu_custom_call.1} parent=1 // pred_fallthru
      _
    // Predicated region
    $region42: #{tpu_custom_call.1} parent=1 // pred_check
      _
    $region43: #{tpu_custom_call.1} parent=1 // pred_check_branch
      %40 = sbr.rel (0) target = $region45
    $region44: #{tpu_custom_call.1} parent=1 // pred_region
      _
    $region45: #{tpu_custom_call.1} parent=1 // pred_fallthru
      _
    // Predicated region
    $region46: #{tpu_custom_call.1} parent=1 // pred_check
      _
    $region47: #{tpu_custom_call.1} parent=1 // pred_check_branch
      %42 = sbr.rel (0) target = $region49
    $region48: #{tpu_custom_call.1} parent=1 // pred_region
      _
    $region49: #{tpu_custom_call.1} parent=1 // pred_fallthru
      _
    // Predicated region
    $region50: #{tpu_custom_call.1} parent=1 // pred_check
      _
    $region51: #{tpu_custom_call.1} parent=1 // pred_check_branch
      %44 = sbr.rel (0) target = $region53
    $region52: #{tpu_custom_call.1} parent=1 // pred_region
      _
    $region53: #{tpu_custom_call.1} parent=1 // pred_fallthru
      _
    %v45 = vld [vmem:[%s0] sm:$0xff]
    %v46 = vld [vmem:[%s0 + $0x8] sm:$0xff]
    %vm47 = vcmask 523264
    %v48 = vsel %vm47, %v45, 0.0
    %49 = vadd.xlane.f32.xlu0 %v48
    %v50 = vpop.xlane.xlu0 %49
    %v51 = vsel %vm47, %v46, 0.0
    %52 = vadd.xlane.f32.xlu0 %v51
    %v53 = vpop.xlane.xlu0 %52
    %v54 = vrcp.pop 64.0
    %v55 = vmul.f32 %v50, %v54
    %v56 = vmul.f32 %v53, %v54
    %v57 = vsub.f32 %v45, %v55
    %v58 = vsub.f32 %v46, %v56
    %v59 = vmul.f32 %v57, %v57
    %v60 = vmul.f32 %v58, %v58
    %v61 = vsel %vm47, %v59, 0.0
    %62 = vadd.xlane.f32.xlu0 %v61
    %v63 = vpop.xlane.xlu0 %62
    %v64 = vsel %vm47, %v60, 0.0
    %65 = vadd.xlane.f32.xlu0 %v64
    %v66 = vpop.xlane.xlu0 %65
    %v67 = vmul.f32 %v63, %v54
    %v68 = vmul.f32 %v66, %v54
    %v69 = vadd.f32 %v67, 1e-05
    %v70 = vadd.f32 %v68, 1e-05
    %v71 = vrsqrt.pop %v69
    %v72 = vrsqrt.pop %v70
    %v73 = vmul.f32 %v57, %v71
    %v74 = vmul.f32 %v58, %v72
    %v75 = vld [vmem:[%s1] sm:$0x1]
    %v77 = vlaneseq
    %v78 = vshrl.u32 %v77, 7
    %v79 = vsub.s32 0, %v78
    %v80 = vrot.slane %v75, %v79
    %v82 = vmul.f32 %v73, %v80
    %v83 = vmul.f32 %v74, %v80
    %v84 = vld [vmem:[%s2] sm:$0x1]
    %v86 = vlaneseq
    %v87 = vshrl.u32 %v86, 7
    %v88 = vsub.s32 0, %v87
    %v89 = vrot.slane %v84, %v88
    %v91 = vadd.f32 %v82, %v89
    %v92 = vadd.f32 %v83, %v89
    %v93 = vld [vmem:[%s3] sm:$0xff]
    %v94 = vld [vmem:[%s3 + $0x8] sm:$0xff]
    %v95 = vld [vmem:[%s3 + $0x10] sm:$0xff]
    %v96 = vld [vmem:[%s3 + $0x18] sm:$0xff]
    %v97 = vld [vmem:[%s3 + $0x20] sm:$0xff]
    %v98 = vld [vmem:[%s3 + $0x28] sm:$0xff]
    %v99 = vld [vmem:[%s3 + $0x30] sm:$0xff]
    %v100 = vld [vmem:[%s3 + $0x38] sm:$0xff]
    %v101 = vld [vmem:[%s3 + $0x40] sm:$0xff]
    %v102 = vld [vmem:[%s3 + $0x48] sm:$0xff]
    %v103 = vld [vmem:[%s3 + $0x50] sm:$0xff]
    %v104 = vld [vmem:[%s3 + $0x58] sm:$0xff]
    %v105 = vld [vmem:[%s3 + $0x60] sm:$0xff]
    %v106 = vld [vmem:[%s3 + $0x68] sm:$0xff]
    %v107 = vld [vmem:[%s3 + $0x70] sm:$0xff]
    %v108 = vld [vmem:[%s3 + $0x78] sm:$0xff]
    %v109 = vld [vmem:[%s4] sm:$0x3]
    %v111 = vlaneseq
    %v112 = vshrl.u32 %v111, 7
    %v113 = vsub.s32 0, %v112
    %v114 = vrot.slane %v109, %v113
    %v115 = vlaneseq
    %v116 = vshrl.u32 %v115, 7
    %v117 = vsub.s32 1, %v116
    %v118 = vrot.slane %v109, %v117
    %v122 = vsel %vm47, %v91, 0
    %v125 = vsel %vm47, %v92, 0
    %127 = vmatprep.subr.mxu0 %v94
    %128 = vmatpush1.msra.mxu0 %v93
    %129 = vmatprep.subr.mxu0 %v96
    %130 = vmatpush1.msra.mxu0 %v95
    %131 = vmatprep.subr.mxu0 %v98
    %132 = vmatpush1.msra.mxu0 %v97
    %133 = vmatprep.subr.mxu0 %v100
    %134 = vmatpush1.msra.mxu0 %v99
    %135 = vmatprep.subr.mxu0 %v102
    %136 = vmatpush1.msra.mxu0 %v101
    %137 = vmatprep.subr.mxu0 %v104
    %138 = vmatpush1.msra.mxu0 %v103
    %139 = vmatprep.subr.mxu0 %v106
    %140 = vmatpush1.msra.mxu0 %v105
    %141 = vmatprep.subr.mxu0 %v108
    %142 = vmatpush1.msra.mxu0 %v107
    %143 = vmatprep.subr.mxu0 0.0
    %144 = vmatpush1.msra.mxu0 0.0
    %145 = vmatprep.subr.mxu0 0.0
    %146 = vmatpush1.msra.mxu0 0.0
    %147 = vmatprep.subr.mxu0 0.0
    %148 = vmatpush1.msra.mxu0 0.0
    %149 = vmatprep.subr.mxu0 0.0
    %150 = vmatpush1.msra.mxu0 0.0
    %151 = vmatprep.subr.mxu0 0.0
    %152 = vmatpush1.msra.mxu0 0.0
    %153 = vmatprep.subr.mxu0 0.0
    %154 = vmatpush1.msra.mxu0 0.0
    %155 = vmatprep.subr.mxu0 0.0
    %156 = vmatpush1.msra.mxu0 0.0
    %157 = vmatprep.subr.mxu0 0.0
    %158 = vmatpush1.msra.mxu0 0.0
    %159 = vmatprep.subr.mxu0 0.0
    %160 = vmatpush1.msra.mxu0 0.0
    %161 = vmatprep.subr.mxu0 0.0
    %162 = vmatpush1.msra.mxu0 0.0
    %163 = vmatprep.subr.mxu0 0.0
    %164 = vmatpush1.msra.mxu0 0.0
    %165 = vmatprep.subr.mxu0 0.0
    %166 = vmatpush1.msra.mxu0 0.0
    %167 = vmatprep.subr.mxu0 0.0
    %168 = vmatpush1.msra.mxu0 0.0
    %169 = vmatprep.subr.mxu0 0.0
    %170 = vmatpush1.msra.mxu0 0.0
    %171 = vmatprep.subr.mxu0 0.0
    %172 = vmatpush1.msra.mxu0 0.0
    %173 = vmatprep.subr.mxu0 0.0
    %174 = vmatpush1.msra.mxu0 0.0
    %175 = vmatprep.subr.mxu0 0.0
    %176 = vmatpush1.msra.mxu0 0.0
    %177 = vmatprep.subr.mxu0 0.0
    %178 = vmatpush1.msra.mxu0 0.0
    %179 = vmatprep.subr.mxu0 0.0
    %180 = vmatpush1.msra.mxu0 0.0
    %181 = vmatprep.subr.mxu0 0.0
    %182 = vmatpush1.msra.mxu0 0.0
    %183 = vmatprep.subr.mxu0 0.0
    %184 = vmatpush1.msra.mxu0 0.0
    %185 = vmatprep.subr.mxu0 0.0
    %186 = vmatpush1.msra.mxu0 0.0
    %187 = vmatprep.subr.mxu0 0.0
    %188 = vmatpush1.msra.mxu0 0.0
    %189 = vmatprep.subr.mxu0 0.0
    %190 = vmatpush1.msra.mxu0 0.0
    %191 = vmatprep.mubr.f32.mxu0 0.0
    %192 = vmatmul.mubr.f32.gmra.mrb[0].mxu0 %v122
    %v193 = vpop.f32.mrb[0].mxu0
    %v194 = vadd.f32 %v114, %v193
    %v195 = vpop.f32.mrb[0].mxu0
    %v196 = vadd.f32 %v118, %v195
    %197 = vmatprep.mubr.f32.mxu0 0.0
    %198 = vmatmul.mubr.f32.gmra.mrb[0].mxu0 %v125
    %v199 = vpop.f32.mrb[0].mxu0
    %v200 = vadd.f32 %v114, %v199
    %v201 = vpop.f32.mrb[0].mxu0
    %v202 = vadd.f32 %v118, %v201
    %203 = vdwg.mxu0
    %v204 = vmul.f32 %v194, 0.25
    %v205 = vmul.f32 %v200, 0.25
    %207 = vrot.lane.b32.xlu0 %v194, 64
    %v208 = vpop.permute.xlu0 %207
    %vm209 = vcmask 130048
    %v211 = vsel %vm209, %v204, 0
    %v213 = vsel %vm209, %v208, 0
    %215 = vmatprep.subr.mxu0 0.0
    %216 = vmatpush1.xpose.msra.mxu0 %v213
    %217 = vmatprep.subr.mxu0 0.0
    %218 = vmatpush1.xpose.msra.mxu0 0.0
    %219 = vmatprep.subr.mxu0 0.0
    %220 = vmatpush1.xpose.msra.mxu0 0.0
    %221 = vmatprep.subr.mxu0 0.0
    %222 = vmatpush1.xpose.msra.mxu0 0.0
    %223 = vmatprep.subr.mxu0 0.0
    %224 = vmatpush1.xpose.msra.mxu0 0.0
    %225 = vmatprep.subr.mxu0 0.0
    %226 = vmatpush1.xpose.msra.mxu0 0.0
    %227 = vmatprep.subr.mxu0 0.0
    %228 = vmatpush1.xpose.msra.mxu0 0.0
    %229 = vmatprep.subr.mxu0 0.0
    %230 = vmatpush1.xpose.msra.mxu0 0.0
    %231 = vmatprep.subr.mxu0 0.0
    %232 = vmatpush1.xpose.msra.mxu0 0.0
    %233 = vmatprep.subr.mxu0 0.0
    %234 = vmatpush1.xpose.msra.mxu0 0.0
    %235 = vmatprep.subr.mxu0 0.0
    %236 = vmatpush1.xpose.msra.mxu0 0.0
    %237 = vmatprep.subr.mxu0 0.0
    %238 = vmatpush1.xpose.msra.mxu0 0.0
    %239 = vmatprep.subr.mxu0 0.0
    %240 = vmatpush1.xpose.msra.mxu0 0.0
    %241 = vmatprep.subr.mxu0 0.0
    %242 = vmatpush1.xpose.msra.mxu0 0.0
    %243 = vmatprep.subr.mxu0 0.0
    %244 = vmatpush1.xpose.msra.mxu0 0.0
    %245 = vmatprep.subr.mxu0 0.0
    %246 = vmatpush1.xpose.msra.mxu0 0.0
    %247 = vmatprep.subr.mxu0 0.0
    %248 = vmatpush1.xpose.msra.mxu0 0.0
    %249 = vmatprep.subr.mxu0 0.0
    %250 = vmatpush1.xpose.msra.mxu0 0.0
    %251 = vmatprep.subr.mxu0 0.0
    %252 = vmatpush1.xpose.msra.mxu0 0.0
    %253 = vmatprep.subr.mxu0 0.0
    %254 = vmatpush1.xpose.msra.mxu0 0.0
    %255 = vmatprep.subr.mxu0 0.0
    %256 = vmatpush1.xpose.msra.mxu0 0.0
    %257 = vmatprep.subr.mxu0 0.0
    %258 = vmatpush1.xpose.msra.mxu0 0.0
    %259 = vmatprep.subr.mxu0 0.0
    %260 = vmatpush1.xpose.msra.mxu0 0.0
    %261 = vmatprep.subr.mxu0 0.0
    %262 = vmatpush1.xpose.msra.mxu0 0.0
    %263 = vmatprep.subr.mxu0 0.0
    %264 = vmatpush1.xpose.msra.mxu0 0.0
    %265 = vmatprep.subr.mxu0 0.0
    %266 = vmatpush1.xpose.msra.mxu0 0.0
    %267 = vmatprep.subr.mxu0 0.0
    %268 = vmatpush1.xpose.msra.mxu0 0.0
    %269 = vmatprep.subr.mxu0 0.0
    %270 = vmatpush1.xpose.msra.mxu0 0.0
    %271 = vmatprep.subr.mxu0 0.0
    %272 = vmatpush1.xpose.msra.mxu0 0.0
    %273 = vmatprep.subr.mxu0 0.0
    %274 = vmatpush1.xpose.msra.mxu0 0.0
    %275 = vmatprep.subr.mxu0 0.0
    %276 = vmatpush1.xpose.msra.mxu0 0.0
    %277 = vmatprep.subr.mxu0 0.0
    %278 = vmatpush1.xpose.msra.mxu0 0.0
    %279 = vmatprep.mubr.f32.mxu0 0.0
    %280 = vmatmul.mubr.f32.gmra.mrb[0].mxu0 %v211
    %v281 = vpop.f32.mrb[0].mxu0
    %v282 = vadd.f32 0.0, %v281
    %v283 = vpop.f32.mrb[0].mxu0
    %284 = vdwg.mxu0
    %286 = vrot.lane.b32.xlu0 %v200, 64
    %v287 = vpop.permute.xlu0 %286
    %v289 = vsel %vm209, %v205, 0
    %v291 = vsel %vm209, %v287, 0
    %293 = vmatprep.subr.mxu0 0.0
    %294 = vmatpush1.xpose.msra.mxu0 %v291
    %295 = vmatprep.subr.mxu0 0.0
    %296 = vmatpush1.xpose.msra.mxu0 0.0
    %297 = vmatprep.subr.mxu0 0.0
    %298 = vmatpush1.xpose.msra.mxu0 0.0
    %299 = vmatprep.subr.mxu0 0.0
    %300 = vmatpush1.xpose.msra.mxu0 0.0
    %301 = vmatprep.subr.mxu0 0.0
    %302 = vmatpush1.xpose.msra.mxu0 0.0
    %303 = vmatprep.subr.mxu0 0.0
    %304 = vmatpush1.xpose.msra.mxu0 0.0
    %305 = vmatprep.subr.mxu0 0.0
    %306 = vmatpush1.xpose.msra.mxu0 0.0
    %307 = vmatprep.subr.mxu0 0.0
    %308 = vmatpush1.xpose.msra.mxu0 0.0
    %309 = vmatprep.subr.mxu0 0.0
    %310 = vmatpush1.xpose.msra.mxu0 0.0
    %311 = vmatprep.subr.mxu0 0.0
    %312 = vmatpush1.xpose.msra.mxu0 0.0
    %313 = vmatprep.subr.mxu0 0.0
    %314 = vmatpush1.xpose.msra.mxu0 0.0
    %315 = vmatprep.subr.mxu0 0.0
    %316 = vmatpush1.xpose.msra.mxu0 0.0
    %317 = vmatprep.subr.mxu0 0.0
    %318 = vmatpush1.xpose.msra.mxu0 0.0
    %319 = vmatprep.subr.mxu0 0.0
    %320 = vmatpush1.xpose.msra.mxu0 0.0
    %321 = vmatprep.subr.mxu0 0.0
    %322 = vmatpush1.xpose.msra.mxu0 0.0
    %323 = vmatprep.subr.mxu0 0.0
    %324 = vmatpush1.xpose.msra.mxu0 0.0
    %325 = vmatprep.subr.mxu0 0.0
    %326 = vmatpush1.xpose.msra.mxu0 0.0
    %327 = vmatprep.subr.mxu0 0.0
    %328 = vmatpush1.xpose.msra.mxu0 0.0
    %329 = vmatprep.subr.mxu0 0.0
    %330 = vmatpush1.xpose.msra.mxu0 0.0
    %331 = vmatprep.subr.mxu0 0.0
    %332 = vmatpush1.xpose.msra.mxu0 0.0
    %333 = vmatprep.subr.mxu0 0.0
    %334 = vmatpush1.xpose.msra.mxu0 0.0
    %335 = vmatprep.subr.mxu0 0.0
    %336 = vmatpush1.xpose.msra.mxu0 0.0
    %337 = vmatprep.subr.mxu0 0.0
    %338 = vmatpush1.xpose.msra.mxu0 0.0
    %339 = vmatprep.subr.mxu0 0.0
    %340 = vmatpush1.xpose.msra.mxu0 0.0
    %341 = vmatprep.subr.mxu0 0.0
    %342 = vmatpush1.xpose.msra.mxu0 0.0
    %343 = vmatprep.subr.mxu0 0.0
    %344 = vmatpush1.xpose.msra.mxu0 0.0
    %345 = vmatprep.subr.mxu0 0.0
    %346 = vmatpush1.xpose.msra.mxu0 0.0
    %347 = vmatprep.subr.mxu0 0.0
    %348 = vmatpush1.xpose.msra.mxu0 0.0
    %349 = vmatprep.subr.mxu0 0.0
    %350 = vmatpush1.xpose.msra.mxu0 0.0
    %351 = vmatprep.subr.mxu0 0.0
    %352 = vmatpush1.xpose.msra.mxu0 0.0
    %353 = vmatprep.subr.mxu0 0.0
    %354 = vmatpush1.xpose.msra.mxu0 0.0
    %355 = vmatprep.subr.mxu0 0.0
    %356 = vmatpush1.xpose.msra.mxu0 0.0
    %357 = vmatprep.mubr.f32.mxu0 0.0
    %358 = vmatmul.mubr.f32.gmra.mrb[0].mxu0 %v289
    %v359 = vpop.f32.mrb[0].mxu0
    %v360 = vadd.f32 0.0, %v359
    %v361 = vpop.f32.mrb[0].mxu0
    %362 = vdwg.mxu0
    %vm363 = vcmask 64512
    %v364 = vsel %vm363, %v282, -inf
    %365 = vmax.xlane.f32.xlu0 %v364
    %v366 = vpop.xlane.xlu0 %365
    %v367 = vsel %vm363, %v360, -inf
    %368 = vmax.xlane.f32.xlu0 %v367
    %v369 = vpop.xlane.xlu0 %368
    %v370 = vsub.f32 %v282, %v366
    %v371 = vsub.f32 %v360, %v369
    %v372 = vmul.f32 %v370, 1.442695
    %v373 = vpow.pop %v372
    %v374 = vmul.f32 %v371, 1.442695
    %v375 = vpow.pop %v374
    %v376 = vsel %vm363, %v373, 0.0
    %377 = vadd.xlane.f32.xlu0 %v376
    %v378 = vpop.xlane.xlu0 %377
    %v379 = vsel %vm363, %v375, 0.0
    %380 = vadd.xlane.f32.xlu0 %v379
    %v381 = vpop.xlane.xlu0 %380
    %v382 = vrcp.pop %v378
    %v383 = vmul.f32 %v373, %v382
    %v384 = vrcp.pop %v381
    %v385 = vmul.f32 %v375, %v384
    %v387 = vsel %vm363, %v383, 0
    %389 = vmatprep.subr.mxu0 0.0
    %390 = vmatpush1.msra.mxu0 %v196
    %391 = vmatprep.subr.mxu0 0.0
    %392 = vmatpush1.msra.mxu0 0.0
    %393 = vmatprep.subr.mxu0 0.0
    %394 = vmatpush1.msra.mxu0 0.0
    %395 = vmatprep.subr.mxu0 0.0
    %396 = vmatpush1.msra.mxu0 0.0
    %397 = vmatprep.subr.mxu0 0.0
    %398 = vmatpush1.msra.mxu0 0.0
    %399 = vmatprep.subr.mxu0 0.0
    %400 = vmatpush1.msra.mxu0 0.0
    %401 = vmatprep.subr.mxu0 0.0
    %402 = vmatpush1.msra.mxu0 0.0
    %403 = vmatprep.subr.mxu0 0.0
    %404 = vmatpush1.msra.mxu0 0.0
    %405 = vmatprep.subr.mxu0 0.0
    %406 = vmatpush1.msra.mxu0 0.0
    %407 = vmatprep.subr.mxu0 0.0
    %408 = vmatpush1.msra.mxu0 0.0
    %409 = vmatprep.subr.mxu0 0.0
    %410 = vmatpush1.msra.mxu0 0.0
    %411 = vmatprep.subr.mxu0 0.0
    %412 = vmatpush1.msra.mxu0 0.0
    %413 = vmatprep.subr.mxu0 0.0
    %414 = vmatpush1.msra.mxu0 0.0
    %415 = vmatprep.subr.mxu0 0.0
    %416 = vmatpush1.msra.mxu0 0.0
    %417 = vmatprep.subr.mxu0 0.0
    %418 = vmatpush1.msra.mxu0 0.0
    %419 = vmatprep.subr.mxu0 0.0
    %420 = vmatpush1.msra.mxu0 0.0
    %421 = vmatprep.subr.mxu0 0.0
    %422 = vmatpush1.msra.mxu0 0.0
    %423 = vmatprep.subr.mxu0 0.0
    %424 = vmatpush1.msra.mxu0 0.0
    %425 = vmatprep.subr.mxu0 0.0
    %426 = vmatpush1.msra.mxu0 0.0
    %427 = vmatprep.subr.mxu0 0.0
    %428 = vmatpush1.msra.mxu0 0.0
    %429 = vmatprep.subr.mxu0 0.0
    %430 = vmatpush1.msra.mxu0 0.0
    %431 = vmatprep.subr.mxu0 0.0
    %432 = vmatpush1.msra.mxu0 0.0
    %433 = vmatprep.subr.mxu0 0.0
    %434 = vmatpush1.msra.mxu0 0.0
    %435 = vmatprep.subr.mxu0 0.0
    %436 = vmatpush1.msra.mxu0 0.0
    %437 = vmatprep.subr.mxu0 0.0
    %438 = vmatpush1.msra.mxu0 0.0
    %439 = vmatprep.subr.mxu0 0.0
    %440 = vmatpush1.msra.mxu0 0.0
    %441 = vmatprep.subr.mxu0 0.0
    %442 = vmatpush1.msra.mxu0 0.0
    %443 = vmatprep.subr.mxu0 0.0
    %444 = vmatpush1.msra.mxu0 0.0
    %445 = vmatprep.subr.mxu0 0.0
    %446 = vmatpush1.msra.mxu0 0.0
    %447 = vmatprep.subr.mxu0 0.0
    %448 = vmatpush1.msra.mxu0 0.0
    %449 = vmatprep.subr.mxu0 0.0
    %450 = vmatpush1.msra.mxu0 0.0
    %451 = vmatprep.subr.mxu0 0.0
    %452 = vmatpush1.msra.mxu0 0.0
    %453 = vmatprep.mubr.f32.mxu0 0.0
    %454 = vmatmul.mubr.f32.gmra.mrb[0].mxu0 %v387
    %v455 = vpop.f32.mrb[0].mxu0
    %v456 = vadd.f32 0.0, %v455
    %v457 = vpop.f32.mrb[0].mxu0
    %458 = vdwg.mxu0
    %v460 = vsel %vm363, %v385, 0
    %462 = vmatprep.subr.mxu0 0.0
    %463 = vmatpush1.msra.mxu0 %v202
    %464 = vmatprep.subr.mxu0 0.0
    %465 = vmatpush1.msra.mxu0 0.0
    %466 = vmatprep.subr.mxu0 0.0
    %467 = vmatpush1.msra.mxu0 0.0
    %468 = vmatprep.subr.mxu0 0.0
    %469 = vmatpush1.msra.mxu0 0.0
    %470 = vmatprep.subr.mxu0 0.0
    %471 = vmatpush1.msra.mxu0 0.0
    %472 = vmatprep.subr.mxu0 0.0
    %473 = vmatpush1.msra.mxu0 0.0
    %474 = vmatprep.subr.mxu0 0.0
    %475 = vmatpush1.msra.mxu0 0.0
    %476 = vmatprep.subr.mxu0 0.0
    %477 = vmatpush1.msra.mxu0 0.0
    %478 = vmatprep.subr.mxu0 0.0
    %479 = vmatpush1.msra.mxu0 0.0
    %480 = vmatprep.subr.mxu0 0.0
    %481 = vmatpush1.msra.mxu0 0.0
    %482 = vmatprep.subr.mxu0 0.0
    %483 = vmatpush1.msra.mxu0 0.0
    %484 = vmatprep.subr.mxu0 0.0
    %485 = vmatpush1.msra.mxu0 0.0
    %486 = vmatprep.subr.mxu0 0.0
    %487 = vmatpush1.msra.mxu0 0.0
    %488 = vmatprep.subr.mxu0 0.0
    %489 = vmatpush1.msra.mxu0 0.0
    %490 = vmatprep.subr.mxu0 0.0
    %491 = vmatpush1.msra.mxu0 0.0
    %492 = vmatprep.subr.mxu0 0.0
    %493 = vmatpush1.msra.mxu0 0.0
    %494 = vmatprep.subr.mxu0 0.0
    %495 = vmatpush1.msra.mxu0 0.0
    %496 = vmatprep.subr.mxu0 0.0
    %497 = vmatpush1.msra.mxu0 0.0
    %498 = vmatprep.subr.mxu0 0.0
    %499 = vmatpush1.msra.mxu0 0.0
    %500 = vmatprep.subr.mxu0 0.0
    %501 = vmatpush1.msra.mxu0 0.0
    %502 = vmatprep.subr.mxu0 0.0
    %503 = vmatpush1.msra.mxu0 0.0
    %504 = vmatprep.subr.mxu0 0.0
    %505 = vmatpush1.msra.mxu0 0.0
    %506 = vmatprep.subr.mxu0 0.0
    %507 = vmatpush1.msra.mxu0 0.0
    %508 = vmatprep.subr.mxu0 0.0
    %509 = vmatpush1.msra.mxu0 0.0
    %510 = vmatprep.subr.mxu0 0.0
    %511 = vmatpush1.msra.mxu0 0.0
    %512 = vmatprep.subr.mxu0 0.0
    %513 = vmatpush1.msra.mxu0 0.0
    %514 = vmatprep.subr.mxu0 0.0
    %515 = vmatpush1.msra.mxu0 0.0
    %516 = vmatprep.subr.mxu0 0.0
    %517 = vmatpush1.msra.mxu0 0.0
    %518 = vmatprep.subr.mxu0 0.0
    %519 = vmatpush1.msra.mxu0 0.0
    %520 = vmatprep.subr.mxu0 0.0
    %521 = vmatpush1.msra.mxu0 0.0
    %522 = vmatprep.subr.mxu0 0.0
    %523 = vmatpush1.msra.mxu0 0.0
    %524 = vmatprep.subr.mxu0 0.0
    %525 = vmatpush1.msra.mxu0 0.0
    %526 = vmatprep.mubr.f32.mxu0 0.0
    %527 = vmatmul.mubr.f32.gmra.mrb[0].mxu0 %v460
    %v528 = vpop.f32.mrb[0].mxu0
    %v529 = vadd.f32 0.0, %v528
    %v530 = vpop.f32.mrb[0].mxu0
    %531 = vdwg.mxu0
    %532 = vrot.lane.b32.xlu0 %v204, 112
    %v533 = vpop.permute.xlu0 %532
    %534 = vrot.lane.b32.xlu0 %v194, 48
    %v535 = vpop.permute.xlu0 %534
    %v536 = vsel %vm209, %v533, 0
    %v538 = vsel %vm209, %v535, 0
    %540 = vmatprep.subr.mxu0 0.0
    %541 = vmatpush1.xpose.msra.mxu0 %v538
    %542 = vmatprep.subr.mxu0 0.0
    %543 = vmatpush1.xpose.msra.mxu0 0.0
    %544 = vmatprep.subr.mxu0 0.0
    %545 = vmatpush1.xpose.msra.mxu0 0.0
    %546 = vmatprep.subr.mxu0 0.0
    %547 = vmatpush1.xpose.msra.mxu0 0.0
    %548 = vmatprep.subr.mxu0 0.0
    %549 = vmatpush1.xpose.msra.mxu0 0.0
    %550 = vmatprep.subr.mxu0 0.0
    %551 = vmatpush1.xpose.msra.mxu0 0.0
    %552 = vmatprep.subr.mxu0 0.0
    %553 = vmatpush1.xpose.msra.mxu0 0.0
    %554 = vmatprep.subr.mxu0 0.0
    %555 = vmatpush1.xpose.msra.mxu0 0.0
    %556 = vmatprep.subr.mxu0 0.0
    %557 = vmatpush1.xpose.msra.mxu0 0.0
    %558 = vmatprep.subr.mxu0 0.0
    %559 = vmatpush1.xpose.msra.mxu0 0.0
    %560 = vmatprep.subr.mxu0 0.0
    %561 = vmatpush1.xpose.msra.mxu0 0.0
    %562 = vmatprep.subr.mxu0 0.0
    %563 = vmatpush1.xpose.msra.mxu0 0.0
    %564 = vmatprep.subr.mxu0 0.0
    %565 = vmatpush1.xpose.msra.mxu0 0.0
    %566 = vmatprep.subr.mxu0 0.0
    %567 = vmatpush1.xpose.msra.mxu0 0.0
    %568 = vmatprep.subr.mxu0 0.0
    %569 = vmatpush1.xpose.msra.mxu0 0.0
    %570 = vmatprep.subr.mxu0 0.0
    %571 = vmatpush1.xpose.msra.mxu0 0.0
    %572 = vmatprep.subr.mxu0 0.0
    %573 = vmatpush1.xpose.msra.mxu0 0.0
    %574 = vmatprep.subr.mxu0 0.0
    %575 = vmatpush1.xpose.msra.mxu0 0.0
    %576 = vmatprep.subr.mxu0 0.0
    %577 = vmatpush1.xpose.msra.mxu0 0.0
    %578 = vmatprep.subr.mxu0 0.0
    %579 = vmatpush1.xpose.msra.mxu0 0.0
    %580 = vmatprep.subr.mxu0 0.0
    %581 = vmatpush1.xpose.msra.mxu0 0.0
    %582 = vmatprep.subr.mxu0 0.0
    %583 = vmatpush1.xpose.msra.mxu0 0.0
    %584 = vmatprep.subr.mxu0 0.0
    %585 = vmatpush1.xpose.msra.mxu0 0.0
    %586 = vmatprep.subr.mxu0 0.0
    %587 = vmatpush1.xpose.msra.mxu0 0.0
    %588 = vmatprep.subr.mxu0 0.0
    %589 = vmatpush1.xpose.msra.mxu0 0.0
    %590 = vmatprep.subr.mxu0 0.0
    %591 = vmatpush1.xpose.msra.mxu0 0.0
    %592 = vmatprep.subr.mxu0 0.0
    %593 = vmatpush1.xpose.msra.mxu0 0.0
    %594 = vmatprep.subr.mxu0 0.0
    %595 = vmatpush1.xpose.msra.mxu0 0.0
    %596 = vmatprep.subr.mxu0 0.0
    %597 = vmatpush1.xpose.msra.mxu0 0.0
    %598 = vmatprep.subr.mxu0 0.0
    %599 = vmatpush1.xpose.msra.mxu0 0.0
    %600 = vmatprep.subr.mxu0 0.0
    %601 = vmatpush1.xpose.msra.mxu0 0.0
    %602 = vmatprep.subr.mxu0 0.0
    %603 = vmatpush1.xpose.msra.mxu0 0.0
    %604 = vmatprep.mubr.f32.mxu0 0.0
    %605 = vmatmul.mubr.f32.gmra.mrb[0].mxu0 %v536
    %v606 = vpop.f32.mrb[0].mxu0
    %v607 = vadd.f32 0.0, %v606
    %v608 = vpop.f32.mrb[0].mxu0
    %609 = vdwg.mxu0
    %610 = vrot.lane.b32.xlu0 %v205, 112
    %v611 = vpop.permute.xlu0 %610
    %612 = vrot.lane.b32.xlu0 %v200, 48
    %v613 = vpop.permute.xlu0 %612
    %v614 = vsel %vm209, %v611, 0
    %v616 = vsel %vm209, %v613, 0
    %618 = vmatprep.subr.mxu0 0.0
    %619 = vmatpush1.xpose.msra.mxu0 %v616
    %620 = vmatprep.subr.mxu0 0.0
    %621 = vmatpush1.xpose.msra.mxu0 0.0
    %622 = vmatprep.subr.mxu0 0.0
    %623 = vmatpush1.xpose.msra.mxu0 0.0
    %624 = vmatprep.subr.mxu0 0.0
    %625 = vmatpush1.xpose.msra.mxu0 0.0
    %626 = vmatprep.subr.mxu0 0.0
    %627 = vmatpush1.xpose.msra.mxu0 0.0
    %628 = vmatprep.subr.mxu0 0.0
    %629 = vmatpush1.xpose.msra.mxu0 0.0
    %630 = vmatprep.subr.mxu0 0.0
    %631 = vmatpush1.xpose.msra.mxu0 0.0
    %632 = vmatprep.subr.mxu0 0.0
    %633 = vmatpush1.xpose.msra.mxu0 0.0
    %634 = vmatprep.subr.mxu0 0.0
    %635 = vmatpush1.xpose.msra.mxu0 0.0
    %636 = vmatprep.subr.mxu0 0.0
    %637 = vmatpush1.xpose.msra.mxu0 0.0
    %638 = vmatprep.subr.mxu0 0.0
    %639 = vmatpush1.xpose.msra.mxu0 0.0
    %640 = vmatprep.subr.mxu0 0.0
    %641 = vmatpush1.xpose.msra.mxu0 0.0
    %642 = vmatprep.subr.mxu0 0.0
    %643 = vmatpush1.xpose.msra.mxu0 0.0
    %644 = vmatprep.subr.mxu0 0.0
    %645 = vmatpush1.xpose.msra.mxu0 0.0
    %646 = vmatprep.subr.mxu0 0.0
    %647 = vmatpush1.xpose.msra.mxu0 0.0
    %648 = vmatprep.subr.mxu0 0.0
    %649 = vmatpush1.xpose.msra.mxu0 0.0
    %650 = vmatprep.subr.mxu0 0.0
    %651 = vmatpush1.xpose.msra.mxu0 0.0
    %652 = vmatprep.subr.mxu0 0.0
    %653 = vmatpush1.xpose.msra.mxu0 0.0
    %654 = vmatprep.subr.mxu0 0.0
    %655 = vmatpush1.xpose.msra.mxu0 0.0
    %656 = vmatprep.subr.mxu0 0.0
    %657 = vmatpush1.xpose.msra.mxu0 0.0
    %658 = vmatprep.subr.mxu0 0.0
    %659 = vmatpush1.xpose.msra.mxu0 0.0
    %660 = vmatprep.subr.mxu0 0.0
    %661 = vmatpush1.xpose.msra.mxu0 0.0
    %662 = vmatprep.subr.mxu0 0.0
    %663 = vmatpush1.xpose.msra.mxu0 0.0
    %664 = vmatprep.subr.mxu0 0.0
    %665 = vmatpush1.xpose.msra.mxu0 0.0
    %666 = vmatprep.subr.mxu0 0.0
    %667 = vmatpush1.xpose.msra.mxu0 0.0
    %668 = vmatprep.subr.mxu0 0.0
    %669 = vmatpush1.xpose.msra.mxu0 0.0
    %670 = vmatprep.subr.mxu0 0.0
    %671 = vmatpush1.xpose.msra.mxu0 0.0
    %672 = vmatprep.subr.mxu0 0.0
    %673 = vmatpush1.xpose.msra.mxu0 0.0
    %674 = vmatprep.subr.mxu0 0.0
    %675 = vmatpush1.xpose.msra.mxu0 0.0
    %676 = vmatprep.subr.mxu0 0.0
    %677 = vmatpush1.xpose.msra.mxu0 0.0
    %678 = vmatprep.subr.mxu0 0.0
    %679 = vmatpush1.xpose.msra.mxu0 0.0
    %680 = vmatprep.subr.mxu0 0.0
    %681 = vmatpush1.xpose.msra.mxu0 0.0
    %682 = vmatprep.mubr.f32.mxu0 0.0
    %683 = vmatmul.mubr.f32.gmra.mrb[0].mxu0 %v614
    %v684 = vpop.f32.mrb[0].mxu0
    %v685 = vadd.f32 0.0, %v684
    %v686 = vpop.f32.mrb[0].mxu0
    %687 = vdwg.mxu0
    %v688 = vsel %vm363, %v607, -inf
    %689 = vmax.xlane.f32.xlu0 %v688
    %v690 = vpop.xlane.xlu0 %689
    %v691 = vsel %vm363, %v685, -inf
    %692 = vmax.xlane.f32.xlu0 %v691
    %v693 = vpop.xlane.xlu0 %692
    %v694 = vsub.f32 %v607, %v690
    %v695 = vsub.f32 %v685, %v693
    %v696 = vmul.f32 %v694, 1.442695
    %v697 = vpow.pop %v696
    %v698 = vmul.f32 %v695, 1.442695
    %v699 = vpow.pop %v698
    %v700 = vsel %vm363, %v697, 0.0
    %701 = vadd.xlane.f32.xlu0 %v700
    %v702 = vpop.xlane.xlu0 %701
    %v703 = vsel %vm363, %v699, 0.0
    %704 = vadd.xlane.f32.xlu0 %v703
    %v705 = vpop.xlane.xlu0 %704
    %v706 = vrcp.pop %v702
    %v707 = vmul.f32 %v697, %v706
    %v708 = vrcp.pop %v705
    %v709 = vmul.f32 %v699, %v708
    %711 = vrot.lane.b32.xlu0 %v196, 112
    %v712 = vpop.permute.xlu0 %711
    %v715 = vsel %vm363, %v707, 0
    %717 = vmatprep.subr.mxu0 0.0
    %718 = vmatpush1.msra.mxu0 %v712
    %719 = vmatprep.subr.mxu0 0.0
    %720 = vmatpush1.msra.mxu0 0.0
    %721 = vmatprep.subr.mxu0 0.0
    %722 = vmatpush1.msra.mxu0 0.0
    %723 = vmatprep.subr.mxu0 0.0
    %724 = vmatpush1.msra.mxu0 0.0
    %725 = vmatprep.subr.mxu0 0.0
    %726 = vmatpush1.msra.mxu0 0.0
    %727 = vmatprep.subr.mxu0 0.0
    %728 = vmatpush1.msra.mxu0 0.0
    %729 = vmatprep.subr.mxu0 0.0
    %730 = vmatpush1.msra.mxu0 0.0
    %731 = vmatprep.subr.mxu0 0.0
    %732 = vmatpush1.msra.mxu0 0.0
    %733 = vmatprep.subr.mxu0 0.0
    %734 = vmatpush1.msra.mxu0 0.0
    %735 = vmatprep.subr.mxu0 0.0
    %736 = vmatpush1.msra.mxu0 0.0
    %737 = vmatprep.subr.mxu0 0.0
    %738 = vmatpush1.msra.mxu0 0.0
    %739 = vmatprep.subr.mxu0 0.0
    %740 = vmatpush1.msra.mxu0 0.0
    %741 = vmatprep.subr.mxu0 0.0
    %742 = vmatpush1.msra.mxu0 0.0
    %743 = vmatprep.subr.mxu0 0.0
    %744 = vmatpush1.msra.mxu0 0.0
    %745 = vmatprep.subr.mxu0 0.0
    %746 = vmatpush1.msra.mxu0 0.0
    %747 = vmatprep.subr.mxu0 0.0
    %748 = vmatpush1.msra.mxu0 0.0
    %749 = vmatprep.subr.mxu0 0.0
    %750 = vmatpush1.msra.mxu0 0.0
    %751 = vmatprep.subr.mxu0 0.0
    %752 = vmatpush1.msra.mxu0 0.0
    %753 = vmatprep.subr.mxu0 0.0
    %754 = vmatpush1.msra.mxu0 0.0
    %755 = vmatprep.subr.mxu0 0.0
    %756 = vmatpush1.msra.mxu0 0.0
    %757 = vmatprep.subr.mxu0 0.0
    %758 = vmatpush1.msra.mxu0 0.0
    %759 = vmatprep.subr.mxu0 0.0
    %760 = vmatpush1.msra.mxu0 0.0
    %761 = vmatprep.subr.mxu0 0.0
    %762 = vmatpush1.msra.mxu0 0.0
    %763 = vmatprep.subr.mxu0 0.0
    %764 = vmatpush1.msra.mxu0 0.0
    %765 = vmatprep.subr.mxu0 0.0
    %766 = vmatpush1.msra.mxu0 0.0
    %767 = vmatprep.subr.mxu0 0.0
    %768 = vmatpush1.msra.mxu0 0.0
    %769 = vmatprep.subr.mxu0 0.0
    %770 = vmatpush1.msra.mxu0 0.0
    %771 = vmatprep.subr.mxu0 0.0
    %772 = vmatpush1.msra.mxu0 0.0
    %773 = vmatprep.subr.mxu0 0.0
    %774 = vmatpush1.msra.mxu0 0.0
    %775 = vmatprep.subr.mxu0 0.0
    %776 = vmatpush1.msra.mxu0 0.0
    %777 = vmatprep.subr.mxu0 0.0
    %778 = vmatpush1.msra.mxu0 0.0
    %779 = vmatprep.subr.mxu0 0.0
    %780 = vmatpush1.msra.mxu0 0.0
    %781 = vmatprep.mubr.f32.mxu0 0.0
    %782 = vmatmul.mubr.f32.gmra.mrb[0].mxu0 %v715
    %v783 = vpop.f32.mrb[0].mxu0
    %v784 = vadd.f32 0.0, %v783
    %v785 = vpop.f32.mrb[0].mxu0
    %786 = vdwg.mxu0
    %788 = vrot.lane.b32.xlu0 %v202, 112
    %v789 = vpop.permute.xlu0 %788
    %v792 = vsel %vm363, %v709, 0
    %794 = vmatprep.subr.mxu0 0.0
    %795 = vmatpush1.msra.mxu0 %v789
    %796 = vmatprep.subr.mxu0 0.0
    %797 = vmatpush1.msra.mxu0 0.0
    %798 = vmatprep.subr.mxu0 0.0
    %799 = vmatpush1.msra.mxu0 0.0
    %800 = vmatprep.subr.mxu0 0.0
    %801 = vmatpush1.msra.mxu0 0.0
    %802 = vmatprep.subr.mxu0 0.0
    %803 = vmatpush1.msra.mxu0 0.0
    %804 = vmatprep.subr.mxu0 0.0
    %805 = vmatpush1.msra.mxu0 0.0
    %806 = vmatprep.subr.mxu0 0.0
    %807 = vmatpush1.msra.mxu0 0.0
    %808 = vmatprep.subr.mxu0 0.0
    %809 = vmatpush1.msra.mxu0 0.0
    %810 = vmatprep.subr.mxu0 0.0
    %811 = vmatpush1.msra.mxu0 0.0
    %812 = vmatprep.subr.mxu0 0.0
    %813 = vmatpush1.msra.mxu0 0.0
    %814 = vmatprep.subr.mxu0 0.0
    %815 = vmatpush1.msra.mxu0 0.0
    %816 = vmatprep.subr.mxu0 0.0
    %817 = vmatpush1.msra.mxu0 0.0
    %818 = vmatprep.subr.mxu0 0.0
    %819 = vmatpush1.msra.mxu0 0.0
    %820 = vmatprep.subr.mxu0 0.0
    %821 = vmatpush1.msra.mxu0 0.0
    %822 = vmatprep.subr.mxu0 0.0
    %823 = vmatpush1.msra.mxu0 0.0
    %824 = vmatprep.subr.mxu0 0.0
    %825 = vmatpush1.msra.mxu0 0.0
    %826 = vmatprep.subr.mxu0 0.0
    %827 = vmatpush1.msra.mxu0 0.0
    %828 = vmatprep.subr.mxu0 0.0
    %829 = vmatpush1.msra.mxu0 0.0
    %830 = vmatprep.subr.mxu0 0.0
    %831 = vmatpush1.msra.mxu0 0.0
    %832 = vmatprep.subr.mxu0 0.0
    %833 = vmatpush1.msra.mxu0 0.0
    %834 = vmatprep.subr.mxu0 0.0
    %835 = vmatpush1.msra.mxu0 0.0
    %836 = vmatprep.subr.mxu0 0.0
    %837 = vmatpush1.msra.mxu0 0.0
    %838 = vmatprep.subr.mxu0 0.0
    %839 = vmatpush1.msra.mxu0 0.0
    %840 = vmatprep.subr.mxu0 0.0
    %841 = vmatpush1.msra.mxu0 0.0
    %842 = vmatprep.subr.mxu0 0.0
    %843 = vmatpush1.msra.mxu0 0.0
    %844 = vmatprep.subr.mxu0 0.0
    %845 = vmatpush1.msra.mxu0 0.0
    %846 = vmatprep.subr.mxu0 0.0
    %847 = vmatpush1.msra.mxu0 0.0
    %848 = vmatprep.subr.mxu0 0.0
    %849 = vmatpush1.msra.mxu0 0.0
    %850 = vmatprep.subr.mxu0 0.0
    %851 = vmatpush1.msra.mxu0 0.0
    %852 = vmatprep.subr.mxu0 0.0
    %853 = vmatpush1.msra.mxu0 0.0
    %854 = vmatprep.subr.mxu0 0.0
    %855 = vmatpush1.msra.mxu0 0.0
    %856 = vmatprep.subr.mxu0 0.0
    %857 = vmatpush1.msra.mxu0 0.0
    %858 = vmatprep.mubr.f32.mxu0 0.0
    %859 = vmatmul.mubr.f32.gmra.mrb[0].mxu0 %v792
    %v860 = vpop.f32.mrb[0].mxu0
    %v861 = vadd.f32 0.0, %v860
    %v862 = vpop.f32.mrb[0].mxu0
    %863 = vdwg.mxu0
    %864 = vrot.lane.b32.xlu0 %v204, 96
    %v865 = vpop.permute.xlu0 %864
    %866 = vrot.lane.b32.xlu0 %v194, 32
    %v867 = vpop.permute.xlu0 %866
    %v868 = vsel %vm209, %v865, 0
    %v870 = vsel %vm209, %v867, 0
    %872 = vmatprep.subr.mxu0 0.0
    %873 = vmatpush1.xpose.msra.mxu0 %v870
    %874 = vmatprep.subr.mxu0 0.0
    %875 = vmatpush1.xpose.msra.mxu0 0.0
    %876 = vmatprep.subr.mxu0 0.0
    %877 = vmatpush1.xpose.msra.mxu0 0.0
    %878 = vmatprep.subr.mxu0 0.0
    %879 = vmatpush1.xpose.msra.mxu0 0.0
    %880 = vmatprep.subr.mxu0 0.0
    %881 = vmatpush1.xpose.msra.mxu0 0.0
    %882 = vmatprep.subr.mxu0 0.0
    %883 = vmatpush1.xpose.msra.mxu0 0.0
    %884 = vmatprep.subr.mxu0 0.0
    %885 = vmatpush1.xpose.msra.mxu0 0.0
    %886 = vmatprep.subr.mxu0 0.0
    %887 = vmatpush1.xpose.msra.mxu0 0.0
    %888 = vmatprep.subr.mxu0 0.0
    %889 = vmatpush1.xpose.msra.mxu0 0.0
    %890 = vmatprep.subr.mxu0 0.0
    %891 = vmatpush1.xpose.msra.mxu0 0.0
    %892 = vmatprep.subr.mxu0 0.0
    %893 = vmatpush1.xpose.msra.mxu0 0.0
    %894 = vmatprep.subr.mxu0 0.0
    %895 = vmatpush1.xpose.msra.mxu0 0.0
    %896 = vmatprep.subr.mxu0 0.0
    %897 = vmatpush1.xpose.msra.mxu0 0.0
    %898 = vmatprep.subr.mxu0 0.0
    %899 = vmatpush1.xpose.msra.mxu0 0.0
    %900 = vmatprep.subr.mxu0 0.0
    %901 = vmatpush1.xpose.msra.mxu0 0.0
    %902 = vmatprep.subr.mxu0 0.0
    %903 = vmatpush1.xpose.msra.mxu0 0.0
    %904 = vmatprep.subr.mxu0 0.0
    %905 = vmatpush1.xpose.msra.mxu0 0.0
    %906 = vmatprep.subr.mxu0 0.0
    %907 = vmatpush1.xpose.msra.mxu0 0.0
    %908 = vmatprep.subr.mxu0 0.0
    %909 = vmatpush1.xpose.msra.mxu0 0.0
    %910 = vmatprep.subr.mxu0 0.0
    %911 = vmatpush1.xpose.msra.mxu0 0.0
    %912 = vmatprep.subr.mxu0 0.0
    %913 = vmatpush1.xpose.msra.mxu0 0.0
    %914 = vmatprep.subr.mxu0 0.0
    %915 = vmatpush1.xpose.msra.mxu0 0.0
    %916 = vmatprep.subr.mxu0 0.0
    %917 = vmatpush1.xpose.msra.mxu0 0.0
    %918 = vmatprep.subr.mxu0 0.0
    %919 = vmatpush1.xpose.msra.mxu0 0.0
    %920 = vmatprep.subr.mxu0 0.0
    %921 = vmatpush1.xpose.msra.mxu0 0.0
    %922 = vmatprep.subr.mxu0 0.0
    %923 = vmatpush1.xpose.msra.mxu0 0.0
    %924 = vmatprep.subr.mxu0 0.0
    %925 = vmatpush1.xpose.msra.mxu0 0.0
    %926 = vmatprep.subr.mxu0 0.0
    %927 = vmatpush1.xpose.msra.mxu0 0.0
    %928 = vmatprep.subr.mxu0 0.0
    %929 = vmatpush1.xpose.msra.mxu0 0.0
    %930 = vmatprep.subr.mxu0 0.0
    %931 = vmatpush1.xpose.msra.mxu0 0.0
    %932 = vmatprep.subr.mxu0 0.0
    %933 = vmatpush1.xpose.msra.mxu0 0.0
    %934 = vmatprep.subr.mxu0 0.0
    %935 = vmatpush1.xpose.msra.mxu0 0.0
    %936 = vmatprep.mubr.f32.mxu0 0.0
    %937 = vmatmul.mubr.f32.gmra.mrb[0].mxu0 %v868
    %v938 = vpop.f32.mrb[0].mxu0
    %v939 = vadd.f32 0.0, %v938
    %v940 = vpop.f32.mrb[0].mxu0
    %941 = vdwg.mxu0
    %942 = vrot.lane.b32.xlu0 %v205, 96
    %v943 = vpop.permute.xlu0 %942
    %944 = vrot.lane.b32.xlu0 %v200, 32
    %v945 = vpop.permute.xlu0 %944
    %v946 = vsel %vm209, %v943, 0
    %v948 = vsel %vm209, %v945, 0
    %950 = vmatprep.subr.mxu0 0.0
    %951 = vmatpush1.xpose.msra.mxu0 %v948
    %952 = vmatprep.subr.mxu0 0.0
    %953 = vmatpush1.xpose.msra.mxu0 0.0
    %954 = vmatprep.subr.mxu0 0.0
    %955 = vmatpush1.xpose.msra.mxu0 0.0
    %956 = vmatprep.subr.mxu0 0.0
    %957 = vmatpush1.xpose.msra.mxu0 0.0
    %958 = vmatprep.subr.mxu0 0.0
    %959 = vmatpush1.xpose.msra.mxu0 0.0
    %960 = vmatprep.subr.mxu0 0.0
    %961 = vmatpush1.xpose.msra.mxu0 0.0
    %962 = vmatprep.subr.mxu0 0.0
    %963 = vmatpush1.xpose.msra.mxu0 0.0
    %964 = vmatprep.subr.mxu0 0.0
    %965 = vmatpush1.xpose.msra.mxu0 0.0
    %966 = vmatprep.subr.mxu0 0.0
    %967 = vmatpush1.xpose.msra.mxu0 0.0
    %968 = vmatprep.subr.mxu0 0.0
    %969 = vmatpush1.xpose.msra.mxu0 0.0
    %970 = vmatprep.subr.mxu0 0.0
    %971 = vmatpush1.xpose.msra.mxu0 0.0
    %972 = vmatprep.subr.mxu0 0.0
    %973 = vmatpush1.xpose.msra.mxu0 0.0
    %974 = vmatprep.subr.mxu0 0.0
    %975 = vmatpush1.xpose.msra.mxu0 0.0
    %976 = vmatprep.subr.mxu0 0.0
    %977 = vmatpush1.xpose.msra.mxu0 0.0
    %978 = vmatprep.subr.mxu0 0.0
    %979 = vmatpush1.xpose.msra.mxu0 0.0
    %980 = vmatprep.subr.mxu0 0.0
    %981 = vmatpush1.xpose.msra.mxu0 0.0
    %982 = vmatprep.subr.mxu0 0.0
    %983 = vmatpush1.xpose.msra.mxu0 0.0
    %984 = vmatprep.subr.mxu0 0.0
    %985 = vmatpush1.xpose.msra.mxu0 0.0
    %986 = vmatprep.subr.mxu0 0.0
    %987 = vmatpush1.xpose.msra.mxu0 0.0
    %988 = vmatprep.subr.mxu0 0.0
    %989 = vmatpush1.xpose.msra.mxu0 0.0
    %990 = vmatprep.subr.mxu0 0.0
    %991 = vmatpush1.xpose.msra.mxu0 0.0
    %992 = vmatprep.subr.mxu0 0.0
    %993 = vmatpush1.xpose.msra.mxu0 0.0
    %994 = vmatprep.subr.mxu0 0.0
    %995 = vmatpush1.xpose.msra.mxu0 0.0
    %996 = vmatprep.subr.mxu0 0.0
    %997 = vmatpush1.xpose.msra.mxu0 0.0
    %998 = vmatprep.subr.mxu0 0.0
    %999 = vmatpush1.xpose.msra.mxu0 0.0
    %1000 = vmatprep.subr.mxu0 0.0
    %1001 = vmatpush1.xpose.msra.mxu0 0.0
    %1002 = vmatprep.subr.mxu0 0.0
    %1003 = vmatpush1.xpose.msra.mxu0 0.0
    %1004 = vmatprep.subr.mxu0 0.0
    %1005 = vmatpush1.xpose.msra.mxu0 0.0
    %1006 = vmatprep.subr.mxu0 0.0
    %1007 = vmatpush1.xpose.msra.mxu0 0.0
    %1008 = vmatprep.subr.mxu0 0.0
    %1009 = vmatpush1.xpose.msra.mxu0 0.0
    %1010 = vmatprep.subr.mxu0 0.0
    %1011 = vmatpush1.xpose.msra.mxu0 0.0
    %1012 = vmatprep.subr.mxu0 0.0
    %1013 = vmatpush1.xpose.msra.mxu0 0.0
    %1014 = vmatprep.mubr.f32.mxu0 0.0
    %1015 = vmatmul.mubr.f32.gmra.mrb[0].mxu0 %v946
    %v1016 = vpop.f32.mrb[0].mxu0
    %v1017 = vadd.f32 0.0, %v1016
    %v1018 = vpop.f32.mrb[0].mxu0
    %1019 = vdwg.mxu0
    %v1020 = vsel %vm363, %v939, -inf
    %1021 = vmax.xlane.f32.xlu0 %v1020
    %v1022 = vpop.xlane.xlu0 %1021
    %v1023 = vsel %vm363, %v1017, -inf
    %1024 = vmax.xlane.f32.xlu0 %v1023
    %v1025 = vpop.xlane.xlu0 %1024
    %v1026 = vsub.f32 %v939, %v1022
    %v1027 = vsub.f32 %v1017, %v1025
    %v1028 = vmul.f32 %v1026, 1.442695
    %v1029 = vpow.pop %v1028
    %v1030 = vmul.f32 %v1027, 1.442695
    %v1031 = vpow.pop %v1030
    %v1032 = vsel %vm363, %v1029, 0.0
    %1033 = vadd.xlane.f32.xlu0 %v1032
    %v1034 = vpop.xlane.xlu0 %1033
    %v1035 = vsel %vm363, %v1031, 0.0
    %1036 = vadd.xlane.f32.xlu0 %v1035
    %v1037 = vpop.xlane.xlu0 %1036
    %v1038 = vrcp.pop %v1034
    %v1039 = vmul.f32 %v1029, %v1038
    %v1040 = vrcp.pop %v1037
    %v1041 = vmul.f32 %v1031, %v1040
    %1042 = vrot.lane.b32.xlu0 %v196, 96
    %v1043 = vpop.permute.xlu0 %1042
    %v1046 = vsel %vm363, %v1039, 0
    %1048 = vmatprep.subr.mxu0 0.0
    %1049 = vmatpush1.msra.mxu0 %v1043
    %1050 = vmatprep.subr.mxu0 0.0
    %1051 = vmatpush1.msra.mxu0 0.0
    %1052 = vmatprep.subr.mxu0 0.0
    %1053 = vmatpush1.msra.mxu0 0.0
    %1054 = vmatprep.subr.mxu0 0.0
    %1055 = vmatpush1.msra.mxu0 0.0
    %1056 = vmatprep.subr.mxu0 0.0
    %1057 = vmatpush1.msra.mxu0 0.0
    %1058 = vmatprep.subr.mxu0 0.0
    %1059 = vmatpush1.msra.mxu0 0.0
    %1060 = vmatprep.subr.mxu0 0.0
    %1061 = vmatpush1.msra.mxu0 0.0
    %1062 = vmatprep.subr.mxu0 0.0
    %1063 = vmatpush1.msra.mxu0 0.0
    %1064 = vmatprep.subr.mxu0 0.0
    %1065 = vmatpush1.msra.mxu0 0.0
    %1066 = vmatprep.subr.mxu0 0.0
    %1067 = vmatpush1.msra.mxu0 0.0
    %1068 = vmatprep.subr.mxu0 0.0
    %1069 = vmatpush1.msra.mxu0 0.0
    %1070 = vmatprep.subr.mxu0 0.0
    %1071 = vmatpush1.msra.mxu0 0.0
    %1072 = vmatprep.subr.mxu0 0.0
    %1073 = vmatpush1.msra.mxu0 0.0
    %1074 = vmatprep.subr.mxu0 0.0
    %1075 = vmatpush1.msra.mxu0 0.0
    %1076 = vmatprep.subr.mxu0 0.0
    %1077 = vmatpush1.msra.mxu0 0.0
    %1078 = vmatprep.subr.mxu0 0.0
    %1079 = vmatpush1.msra.mxu0 0.0
    %1080 = vmatprep.subr.mxu0 0.0
    %1081 = vmatpush1.msra.mxu0 0.0
    %1082 = vmatprep.subr.mxu0 0.0
    %1083 = vmatpush1.msra.mxu0 0.0
    %1084 = vmatprep.subr.mxu0 0.0
    %1085 = vmatpush1.msra.mxu0 0.0
    %1086 = vmatprep.subr.mxu0 0.0
    %1087 = vmatpush1.msra.mxu0 0.0
    %1088 = vmatprep.subr.mxu0 0.0
    %1089 = vmatpush1.msra.mxu0 0.0
    %1090 = vmatprep.subr.mxu0 0.0
    %1091 = vmatpush1.msra.mxu0 0.0
    %1092 = vmatprep.subr.mxu0 0.0
    %1093 = vmatpush1.msra.mxu0 0.0
    %1094 = vmatprep.subr.mxu0 0.0
    %1095 = vmatpush1.msra.mxu0 0.0
    %1096 = vmatprep.subr.mxu0 0.0
    %1097 = vmatpush1.msra.mxu0 0.0
    %1098 = vmatprep.subr.mxu0 0.0
    %1099 = vmatpush1.msra.mxu0 0.0
    %1100 = vmatprep.subr.mxu0 0.0
    %1101 = vmatpush1.msra.mxu0 0.0
    %1102 = vmatprep.subr.mxu0 0.0
    %1103 = vmatpush1.msra.mxu0 0.0
    %1104 = vmatprep.subr.mxu0 0.0
    %1105 = vmatpush1.msra.mxu0 0.0
    %1106 = vmatprep.subr.mxu0 0.0
    %1107 = vmatpush1.msra.mxu0 0.0
    %1108 = vmatprep.subr.mxu0 0.0
    %1109 = vmatpush1.msra.mxu0 0.0
    %1110 = vmatprep.subr.mxu0 0.0
    %1111 = vmatpush1.msra.mxu0 0.0
    %1112 = vmatprep.mubr.f32.mxu0 0.0
    %1113 = vmatmul.mubr.f32.gmra.mrb[0].mxu0 %v1046
    %v1114 = vpop.f32.mrb[0].mxu0
    %v1115 = vadd.f32 0.0, %v1114
    %v1116 = vpop.f32.mrb[0].mxu0
    %1117 = vdwg.mxu0
    %1118 = vrot.lane.b32.xlu0 %v202, 96
    %v1119 = vpop.permute.xlu0 %1118
    %v1122 = vsel %vm363, %v1041, 0
    %1124 = vmatprep.subr.mxu0 0.0
    %1125 = vmatpush1.msra.mxu0 %v1119
    %1126 = vmatprep.subr.mxu0 0.0
    %1127 = vmatpush1.msra.mxu0 0.0
    %1128 = vmatprep.subr.mxu0 0.0
    %1129 = vmatpush1.msra.mxu0 0.0
    %1130 = vmatprep.subr.mxu0 0.0
    %1131 = vmatpush1.msra.mxu0 0.0
    %1132 = vmatprep.subr.mxu0 0.0
    %1133 = vmatpush1.msra.mxu0 0.0
    %1134 = vmatprep.subr.mxu0 0.0
    %1135 = vmatpush1.msra.mxu0 0.0
    %1136 = vmatprep.subr.mxu0 0.0
    %1137 = vmatpush1.msra.mxu0 0.0
    %1138 = vmatprep.subr.mxu0 0.0
    %1139 = vmatpush1.msra.mxu0 0.0
    %1140 = vmatprep.subr.mxu0 0.0
    %1141 = vmatpush1.msra.mxu0 0.0
    %1142 = vmatprep.subr.mxu0 0.0
    %1143 = vmatpush1.msra.mxu0 0.0
    %1144 = vmatprep.subr.mxu0 0.0
    %1145 = vmatpush1.msra.mxu0 0.0
    %1146 = vmatprep.subr.mxu0 0.0
    %1147 = vmatpush1.msra.mxu0 0.0
    %1148 = vmatprep.subr.mxu0 0.0
    %1149 = vmatpush1.msra.mxu0 0.0
    %1150 = vmatprep.subr.mxu0 0.0
    %1151 = vmatpush1.msra.mxu0 0.0
    %1152 = vmatprep.subr.mxu0 0.0
    %1153 = vmatpush1.msra.mxu0 0.0
    %1154 = vmatprep.subr.mxu0 0.0
    %1155 = vmatpush1.msra.mxu0 0.0
    %1156 = vmatprep.subr.mxu0 0.0
    %1157 = vmatpush1.msra.mxu0 0.0
    %1158 = vmatprep.subr.mxu0 0.0
    %1159 = vmatpush1.msra.mxu0 0.0
    %1160 = vmatprep.subr.mxu0 0.0
    %1161 = vmatpush1.msra.mxu0 0.0
    %1162 = vmatprep.subr.mxu0 0.0
    %1163 = vmatpush1.msra.mxu0 0.0
    %1164 = vmatprep.subr.mxu0 0.0
    %1165 = vmatpush1.msra.mxu0 0.0
    %1166 = vmatprep.subr.mxu0 0.0
    %1167 = vmatpush1.msra.mxu0 0.0
    %1168 = vmatprep.subr.mxu0 0.0
    %1169 = vmatpush1.msra.mxu0 0.0
    %1170 = vmatprep.subr.mxu0 0.0
    %1171 = vmatpush1.msra.mxu0 0.0
    %1172 = vmatprep.subr.mxu0 0.0
    %1173 = vmatpush1.msra.mxu0 0.0
    %1174 = vmatprep.subr.mxu0 0.0
    %1175 = vmatpush1.msra.mxu0 0.0
    %1176 = vmatprep.subr.mxu0 0.0
    %1177 = vmatpush1.msra.mxu0 0.0
    %1178 = vmatprep.subr.mxu0 0.0
    %1179 = vmatpush1.msra.mxu0 0.0
    %1180 = vmatprep.subr.mxu0 0.0
    %1181 = vmatpush1.msra.mxu0 0.0
    %1182 = vmatprep.subr.mxu0 0.0
    %1183 = vmatpush1.msra.mxu0 0.0
    %1184 = vmatprep.subr.mxu0 0.0
    %1185 = vmatpush1.msra.mxu0 0.0
    %1186 = vmatprep.subr.mxu0 0.0
    %1187 = vmatpush1.msra.mxu0 0.0
    %1188 = vmatprep.mubr.f32.mxu0 0.0
    %1189 = vmatmul.mubr.f32.gmra.mrb[0].mxu0 %v1122
    %v1190 = vpop.f32.mrb[0].mxu0
    %v1191 = vadd.f32 0.0, %v1190
    %v1192 = vpop.f32.mrb[0].mxu0
    %1193 = vdwg.mxu0
    %1194 = vrot.lane.b32.xlu0 %v204, 80
    %v1195 = vpop.permute.xlu0 %1194
    %1196 = vrot.lane.b32.xlu0 %v194, 16
    %v1197 = vpop.permute.xlu0 %1196
    %v1198 = vsel %vm209, %v1195, 0
    %v1200 = vsel %vm209, %v1197, 0
    %1202 = vmatprep.subr.mxu0 0.0
    %1203 = vmatpush1.xpose.msra.mxu0 %v1200
    %1204 = vmatprep.subr.mxu0 0.0
    %1205 = vmatpush1.xpose.msra.mxu0 0.0
    %1206 = vmatprep.subr.mxu0 0.0
    %1207 = vmatpush1.xpose.msra.mxu0 0.0
    %1208 = vmatprep.subr.mxu0 0.0
    %1209 = vmatpush1.xpose.msra.mxu0 0.0
    %1210 = vmatprep.subr.mxu0 0.0
    %1211 = vmatpush1.xpose.msra.mxu0 0.0
    %1212 = vmatprep.subr.mxu0 0.0
    %1213 = vmatpush1.xpose.msra.mxu0 0.0
    %1214 = vmatprep.subr.mxu0 0.0
    %1215 = vmatpush1.xpose.msra.mxu0 0.0
    %1216 = vmatprep.subr.mxu0 0.0
    %1217 = vmatpush1.xpose.msra.mxu0 0.0
    %1218 = vmatprep.subr.mxu0 0.0
    %1219 = vmatpush1.xpose.msra.mxu0 0.0
    %1220 = vmatprep.subr.mxu0 0.0
    %1221 = vmatpush1.xpose.msra.mxu0 0.0
    %1222 = vmatprep.subr.mxu0 0.0
    %1223 = vmatpush1.xpose.msra.mxu0 0.0
    %1224 = vmatprep.subr.mxu0 0.0
    %1225 = vmatpush1.xpose.msra.mxu0 0.0
    %1226 = vmatprep.subr.mxu0 0.0
    %1227 = vmatpush1.xpose.msra.mxu0 0.0
    %1228 = vmatprep.subr.mxu0 0.0
    %1229 = vmatpush1.xpose.msra.mxu0 0.0
    %1230 = vmatprep.subr.mxu0 0.0
    %1231 = vmatpush1.xpose.msra.mxu0 0.0
    %1232 = vmatprep.subr.mxu0 0.0
    %1233 = vmatpush1.xpose.msra.mxu0 0.0
    %1234 = vmatprep.subr.mxu0 0.0
    %1235 = vmatpush1.xpose.msra.mxu0 0.0
    %1236 = vmatprep.subr.mxu0 0.0
    %1237 = vmatpush1.xpose.msra.mxu0 0.0
    %1238 = vmatprep.subr.mxu0 0.0
    %1239 = vmatpush1.xpose.msra.mxu0 0.0
    %1240 = vmatprep.subr.mxu0 0.0
    %1241 = vmatpush1.xpose.msra.mxu0 0.0
    %1242 = vmatprep.subr.mxu0 0.0
    %1243 = vmatpush1.xpose.msra.mxu0 0.0
    %1244 = vmatprep.subr.mxu0 0.0
    %1245 = vmatpush1.xpose.msra.mxu0 0.0
    %1246 = vmatprep.subr.mxu0 0.0
    %1247 = vmatpush1.xpose.msra.mxu0 0.0
    %1248 = vmatprep.subr.mxu0 0.0
    %1249 = vmatpush1.xpose.msra.mxu0 0.0
    %1250 = vmatprep.subr.mxu0 0.0
    %1251 = vmatpush1.xpose.msra.mxu0 0.0
    %1252 = vmatprep.subr.mxu0 0.0
    %1253 = vmatpush1.xpose.msra.mxu0 0.0
    %1254 = vmatprep.subr.mxu0 0.0
    %1255 = vmatpush1.xpose.msra.mxu0 0.0
    %1256 = vmatprep.subr.mxu0 0.0
    %1257 = vmatpush1.xpose.msra.mxu0 0.0
    %1258 = vmatprep.subr.mxu0 0.0
    %1259 = vmatpush1.xpose.msra.mxu0 0.0
    %1260 = vmatprep.subr.mxu0 0.0
    %1261 = vmatpush1.xpose.msra.mxu0 0.0
    %1262 = vmatprep.subr.mxu0 0.0
    %1263 = vmatpush1.xpose.msra.mxu0 0.0
    %1264 = vmatprep.subr.mxu0 0.0
    %1265 = vmatpush1.xpose.msra.mxu0 0.0
    %1266 = vmatprep.mubr.f32.mxu0 0.0
    %1267 = vmatmul.mubr.f32.gmra.mrb[0].mxu0 %v1198
    %v1268 = vpop.f32.mrb[0].mxu0
    %v1269 = vadd.f32 0.0, %v1268
    %v1270 = vpop.f32.mrb[0].mxu0
    %1271 = vdwg.mxu0
    %1272 = vrot.lane.b32.xlu0 %v205, 80
    %v1273 = vpop.permute.xlu0 %1272
    %1274 = vrot.lane.b32.xlu0 %v200, 16
    %v1275 = vpop.permute.xlu0 %1274
    %v1276 = vsel %vm209, %v1273, 0
    %v1278 = vsel %vm209, %v1275, 0
    %1280 = vmatprep.subr.mxu0 0.0
    %1281 = vmatpush1.xpose.msra.mxu0 %v1278
    %1282 = vmatprep.subr.mxu0 0.0
    %1283 = vmatpush1.xpose.msra.mxu0 0.0
    %1284 = vmatprep.subr.mxu0 0.0
    %1285 = vmatpush1.xpose.msra.mxu0 0.0
    %1286 = vmatprep.subr.mxu0 0.0
    %1287 = vmatpush1.xpose.msra.mxu0 0.0
    %1288 = vmatprep.subr.mxu0 0.0
    %1289 = vmatpush1.xpose.msra.mxu0 0.0
    %1290 = vmatprep.subr.mxu0 0.0
    %1291 = vmatpush1.xpose.msra.mxu0 0.0
    %1292 = vmatprep.subr.mxu0 0.0
    %1293 = vmatpush1.xpose.msra.mxu0 0.0
    %1294 = vmatprep.subr.mxu0 0.0
    %1295 = vmatpush1.xpose.msra.mxu0 0.0
    %1296 = vmatprep.subr.mxu0 0.0
    %1297 = vmatpush1.xpose.msra.mxu0 0.0
    %1298 = vmatprep.subr.mxu0 0.0
    %1299 = vmatpush1.xpose.msra.mxu0 0.0
    %1300 = vmatprep.subr.mxu0 0.0
    %1301 = vmatpush1.xpose.msra.mxu0 0.0
    %1302 = vmatprep.subr.mxu0 0.0
    %1303 = vmatpush1.xpose.msra.mxu0 0.0
    %1304 = vmatprep.subr.mxu0 0.0
    %1305 = vmatpush1.xpose.msra.mxu0 0.0
    %1306 = vmatprep.subr.mxu0 0.0
    %1307 = vmatpush1.xpose.msra.mxu0 0.0
    %1308 = vmatprep.subr.mxu0 0.0
    %1309 = vmatpush1.xpose.msra.mxu0 0.0
    %1310 = vmatprep.subr.mxu0 0.0
    %1311 = vmatpush1.xpose.msra.mxu0 0.0
    %1312 = vmatprep.subr.mxu0 0.0
    %1313 = vmatpush1.xpose.msra.mxu0 0.0
    %1314 = vmatprep.subr.mxu0 0.0
    %1315 = vmatpush1.xpose.msra.mxu0 0.0
    %1316 = vmatprep.subr.mxu0 0.0
    %1317 = vmatpush1.xpose.msra.mxu0 0.0
    %1318 = vmatprep.subr.mxu0 0.0
    %1319 = vmatpush1.xpose.msra.mxu0 0.0
    %1320 = vmatprep.subr.mxu0 0.0
    %1321 = vmatpush1.xpose.msra.mxu0 0.0
    %1322 = vmatprep.subr.mxu0 0.0
    %1323 = vmatpush1.xpose.msra.mxu0 0.0
    %1324 = vmatprep.subr.mxu0 0.0
    %1325 = vmatpush1.xpose.msra.mxu0 0.0
    %1326 = vmatprep.subr.mxu0 0.0
    %1327 = vmatpush1.xpose.msra.mxu0 0.0
    %1328 = vmatprep.subr.mxu0 0.0
    %1329 = vmatpush1.xpose.msra.mxu0 0.0
    %1330 = vmatprep.subr.mxu0 0.0
    %1331 = vmatpush1.xpose.msra.mxu0 0.0
    %1332 = vmatprep.subr.mxu0 0.0
    %1333 = vmatpush1.xpose.msra.mxu0 0.0
    %1334 = vmatprep.subr.mxu0 0.0
    %1335 = vmatpush1.xpose.msra.mxu0 0.0
    %1336 = vmatprep.subr.mxu0 0.0
    %1337 = vmatpush1.xpose.msra.mxu0 0.0
    %1338 = vmatprep.subr.mxu0 0.0
    %1339 = vmatpush1.xpose.msra.mxu0 0.0
    %1340 = vmatprep.subr.mxu0 0.0
    %1341 = vmatpush1.xpose.msra.mxu0 0.0
    %1342 = vmatprep.subr.mxu0 0.0
    %1343 = vmatpush1.xpose.msra.mxu0 0.0
    %1344 = vmatprep.mubr.f32.mxu0 0.0
    %1345 = vmatmul.mubr.f32.gmra.mrb[0].mxu0 %v1276
    %v1346 = vpop.f32.mrb[0].mxu0
    %v1347 = vadd.f32 0.0, %v1346
    %v1348 = vpop.f32.mrb[0].mxu0
    %1349 = vdwg.mxu0
    %v1350 = vsel %vm363, %v1269, -inf
    %1351 = vmax.xlane.f32.xlu0 %v1350
    %v1352 = vpop.xlane.xlu0 %1351
    %v1353 = vsel %vm363, %v1347, -inf
    %1354 = vmax.xlane.f32.xlu0 %v1353
    %v1355 = vpop.xlane.xlu0 %1354
    %v1356 = vsub.f32 %v1269, %v1352
    %v1357 = vsub.f32 %v1347, %v1355
    %v1358 = vmul.f32 %v1356, 1.442695
    %v1359 = vpow.pop %v1358
    %v1360 = vmul.f32 %v1357, 1.442695
    %v1361 = vpow.pop %v1360
    %v1362 = vsel %vm363, %v1359, 0.0
    %1363 = vadd.xlane.f32.xlu0 %v1362
    %v1364 = vpop.xlane.xlu0 %1363
    %v1365 = vsel %vm363, %v1361, 0.0
    %1366 = vadd.xlane.f32.xlu0 %v1365
    %v1367 = vpop.xlane.xlu0 %1366
    %v1368 = vrcp.pop %v1364
    %v1369 = vmul.f32 %v1359, %v1368
    %v1370 = vrcp.pop %v1367
    %v1371 = vmul.f32 %v1361, %v1370
    %1372 = vrot.lane.b32.xlu0 %v196, 80
    %v1373 = vpop.permute.xlu0 %1372
    %v1376 = vsel %vm363, %v1369, 0
    %1378 = vmatprep.subr.mxu0 0.0
    %1379 = vmatpush1.msra.mxu0 %v1373
    %1380 = vmatprep.subr.mxu0 0.0
    %1381 = vmatpush1.msra.mxu0 0.0
    %1382 = vmatprep.subr.mxu0 0.0
    %1383 = vmatpush1.msra.mxu0 0.0
    %1384 = vmatprep.subr.mxu0 0.0
    %1385 = vmatpush1.msra.mxu0 0.0
    %1386 = vmatprep.subr.mxu0 0.0
    %1387 = vmatpush1.msra.mxu0 0.0
    %1388 = vmatprep.subr.mxu0 0.0
    %1389 = vmatpush1.msra.mxu0 0.0
    %1390 = vmatprep.subr.mxu0 0.0
    %1391 = vmatpush1.msra.mxu0 0.0
    %1392 = vmatprep.subr.mxu0 0.0
    %1393 = vmatpush1.msra.mxu0 0.0
    %1394 = vmatprep.subr.mxu0 0.0
    %1395 = vmatpush1.msra.mxu0 0.0
    %1396 = vmatprep.subr.mxu0 0.0
    %1397 = vmatpush1.msra.mxu0 0.0
    %1398 = vmatprep.subr.mxu0 0.0
    %1399 = vmatpush1.msra.mxu0 0.0
    %1400 = vmatprep.subr.mxu0 0.0
    %1401 = vmatpush1.msra.mxu0 0.0
    %1402 = vmatprep.subr.mxu0 0.0
    %1403 = vmatpush1.msra.mxu0 0.0
    %1404 = vmatprep.subr.mxu0 0.0
    %1405 = vmatpush1.msra.mxu0 0.0
    %1406 = vmatprep.subr.mxu0 0.0
    %1407 = vmatpush1.msra.mxu0 0.0
    %1408 = vmatprep.subr.mxu0 0.0
    %1409 = vmatpush1.msra.mxu0 0.0
    %1410 = vmatprep.subr.mxu0 0.0
    %1411 = vmatpush1.msra.mxu0 0.0
    %1412 = vmatprep.subr.mxu0 0.0
    %1413 = vmatpush1.msra.mxu0 0.0
    %1414 = vmatprep.subr.mxu0 0.0
    %1415 = vmatpush1.msra.mxu0 0.0
    %1416 = vmatprep.subr.mxu0 0.0
    %1417 = vmatpush1.msra.mxu0 0.0
    %1418 = vmatprep.subr.mxu0 0.0
    %1419 = vmatpush1.msra.mxu0 0.0
    %1420 = vmatprep.subr.mxu0 0.0
    %1421 = vmatpush1.msra.mxu0 0.0
    %1422 = vmatprep.subr.mxu0 0.0
    %1423 = vmatpush1.msra.mxu0 0.0
    %1424 = vmatprep.subr.mxu0 0.0
    %1425 = vmatpush1.msra.mxu0 0.0
    %1426 = vmatprep.subr.mxu0 0.0
    %1427 = vmatpush1.msra.mxu0 0.0
    %1428 = vmatprep.subr.mxu0 0.0
    %1429 = vmatpush1.msra.mxu0 0.0
    %1430 = vmatprep.subr.mxu0 0.0
    %1431 = vmatpush1.msra.mxu0 0.0
    %1432 = vmatprep.subr.mxu0 0.0
    %1433 = vmatpush1.msra.mxu0 0.0
    %1434 = vmatprep.subr.mxu0 0.0
    %1435 = vmatpush1.msra.mxu0 0.0
    %1436 = vmatprep.subr.mxu0 0.0
    %1437 = vmatpush1.msra.mxu0 0.0
    %1438 = vmatprep.subr.mxu0 0.0
    %1439 = vmatpush1.msra.mxu0 0.0
    %1440 = vmatprep.subr.mxu0 0.0
    %1441 = vmatpush1.msra.mxu0 0.0
    %1442 = vmatprep.mubr.f32.mxu0 0.0
    %1443 = vmatmul.mubr.f32.gmra.mrb[0].mxu0 %v1376
    %v1444 = vpop.f32.mrb[0].mxu0
    %v1445 = vadd.f32 0.0, %v1444
    %v1446 = vpop.f32.mrb[0].mxu0
    %1447 = vdwg.mxu0
    %1448 = vrot.lane.b32.xlu0 %v202, 80
    %v1449 = vpop.permute.xlu0 %1448
    %v1452 = vsel %vm363, %v1371, 0
    %1454 = vmatprep.subr.mxu0 0.0
    %1455 = vmatpush1.msra.mxu0 %v1449
    %1456 = vmatprep.subr.mxu0 0.0
    %1457 = vmatpush1.msra.mxu0 0.0
    %1458 = vmatprep.subr.mxu0 0.0
    %1459 = vmatpush1.msra.mxu0 0.0
    %1460 = vmatprep.subr.mxu0 0.0
    %1461 = vmatpush1.msra.mxu0 0.0
    %1462 = vmatprep.subr.mxu0 0.0
    %1463 = vmatpush1.msra.mxu0 0.0
    %1464 = vmatprep.subr.mxu0 0.0
    %1465 = vmatpush1.msra.mxu0 0.0
    %1466 = vmatprep.subr.mxu0 0.0
    %1467 = vmatpush1.msra.mxu0 0.0
    %1468 = vmatprep.subr.mxu0 0.0
    %1469 = vmatpush1.msra.mxu0 0.0
    %1470 = vmatprep.subr.mxu0 0.0
    %1471 = vmatpush1.msra.mxu0 0.0
    %1472 = vmatprep.subr.mxu0 0.0
    %1473 = vmatpush1.msra.mxu0 0.0
    %1474 = vmatprep.subr.mxu0 0.0
    %1475 = vmatpush1.msra.mxu0 0.0
    %1476 = vmatprep.subr.mxu0 0.0
    %1477 = vmatpush1.msra.mxu0 0.0
    %1478 = vmatprep.subr.mxu0 0.0
    %1479 = vmatpush1.msra.mxu0 0.0
    %1480 = vmatprep.subr.mxu0 0.0
    %1481 = vmatpush1.msra.mxu0 0.0
    %1482 = vmatprep.subr.mxu0 0.0
    %1483 = vmatpush1.msra.mxu0 0.0
    %1484 = vmatprep.subr.mxu0 0.0
    %1485 = vmatpush1.msra.mxu0 0.0
    %1486 = vmatprep.subr.mxu0 0.0
    %1487 = vmatpush1.msra.mxu0 0.0
    %1488 = vmatprep.subr.mxu0 0.0
    %1489 = vmatpush1.msra.mxu0 0.0
    %1490 = vmatprep.subr.mxu0 0.0
    %1491 = vmatpush1.msra.mxu0 0.0
    %1492 = vmatprep.subr.mxu0 0.0
    %1493 = vmatpush1.msra.mxu0 0.0
    %1494 = vmatprep.subr.mxu0 0.0
    %1495 = vmatpush1.msra.mxu0 0.0
    %1496 = vmatprep.subr.mxu0 0.0
    %1497 = vmatpush1.msra.mxu0 0.0
    %1498 = vmatprep.subr.mxu0 0.0
    %1499 = vmatpush1.msra.mxu0 0.0
    %1500 = vmatprep.subr.mxu0 0.0
    %1501 = vmatpush1.msra.mxu0 0.0
    %1502 = vmatprep.subr.mxu0 0.0
    %1503 = vmatpush1.msra.mxu0 0.0
    %1504 = vmatprep.subr.mxu0 0.0
    %1505 = vmatpush1.msra.mxu0 0.0
    %1506 = vmatprep.subr.mxu0 0.0
    %1507 = vmatpush1.msra.mxu0 0.0
    %1508 = vmatprep.subr.mxu0 0.0
    %1509 = vmatpush1.msra.mxu0 0.0
    %1510 = vmatprep.subr.mxu0 0.0
    %1511 = vmatpush1.msra.mxu0 0.0
    %1512 = vmatprep.subr.mxu0 0.0
    %1513 = vmatpush1.msra.mxu0 0.0
    %1514 = vmatprep.subr.mxu0 0.0
    %1515 = vmatpush1.msra.mxu0 0.0
    %1516 = vmatprep.subr.mxu0 0.0
    %1517 = vmatpush1.msra.mxu0 0.0
    %1518 = vmatprep.mubr.f32.mxu0 0.0
    %1519 = vmatmul.mubr.f32.gmra.mrb[0].mxu0 %v1452
    %v1520 = vpop.f32.mrb[0].mxu0
    %v1521 = vadd.f32 0.0, %v1520
    %v1522 = vpop.f32.mrb[0].mxu0
    %1523 = vdwg.mxu0
    %1526 = vrot.lane.b32.xlu0 %v784, 16
    %v1527 = vpop.permute.xlu0 %1526
    %1528 = vrot.lane.b32.xlu0 %v861, 16
    %v1529 = vpop.permute.xlu0 %1528
    %1534 = vrot.lane.b32.xlu0 %v1115, 32
    %v1535 = vpop.permute.xlu0 %1534
    %1536 = vrot.lane.b32.xlu0 %v1191, 32
    %v1537 = vpop.permute.xlu0 %1536
    %1542 = vrot.lane.b32.xlu0 %v1445, 48
    %v1543 = vpop.permute.xlu0 %1542
    %1544 = vrot.lane.b32.xlu0 %v1521, 48
    %v1545 = vpop.permute.xlu0 %1544
    %v1548 = vsel %vm209, %v456, %v1527
    %v1549 = vsel %vm209, %v529, %v1529
    %vm1550 = vcmask 261120
    %v1551 = vsel %vm1550, %v1548, %v1535
    %v1552 = vsel %vm1550, %v1549, %v1537
    %vm1553 = vcmask 392192
    %v1554 = vsel %vm1553, %v1551, %v1543
    %v1555 = vsel %vm1553, %v1552, %v1545
    %v1556 = vld [vmem:[%s5] sm:$0xff]
    %v1557 = vld [vmem:[%s5 + $0x8] sm:$0xff]
    %v1558 = vld [vmem:[%s5 + $0x10] sm:$0xff]
    %v1559 = vld [vmem:[%s5 + $0x18] sm:$0xff]
    %v1560 = vld [vmem:[%s5 + $0x20] sm:$0xff]
    %v1561 = vld [vmem:[%s5 + $0x28] sm:$0xff]
    %v1562 = vld [vmem:[%s5 + $0x30] sm:$0xff]
    %v1563 = vld [vmem:[%s5 + $0x38] sm:$0xff]
    %v1565 = vsel %vm47, %v1554, 0
    %v1568 = vsel %vm47, %v1555, 0
    %1570 = vmatprep.subr.mxu0 0.0
    %1571 = vmatpush1.msra.mxu0 %v1556
    %1572 = vmatprep.subr.mxu0 0.0
    %1573 = vmatpush1.msra.mxu0 %v1557
    %1574 = vmatprep.subr.mxu0 0.0
    %1575 = vmatpush1.msra.mxu0 %v1558
    %1576 = vmatprep.subr.mxu0 0.0
    %1577 = vmatpush1.msra.mxu0 %v1559
    %1578 = vmatprep.subr.mxu0 0.0
    %1579 = vmatpush1.msra.mxu0 %v1560
    %1580 = vmatprep.subr.mxu0 0.0
    %1581 = vmatpush1.msra.mxu0 %v1561
    %1582 = vmatprep.subr.mxu0 0.0
    %1583 = vmatpush1.msra.mxu0 %v1562
    %1584 = vmatprep.subr.mxu0 0.0
    %1585 = vmatpush1.msra.mxu0 %v1563
    %1586 = vmatprep.subr.mxu0 0.0
    %1587 = vmatpush1.msra.mxu0 0.0
    %1588 = vmatprep.subr.mxu0 0.0
    %1589 = vmatpush1.msra.mxu0 0.0
    %1590 = vmatprep.subr.mxu0 0.0
    %1591 = vmatpush1.msra.mxu0 0.0
    %1592 = vmatprep.subr.mxu0 0.0
    %1593 = vmatpush1.msra.mxu0 0.0
    %1594 = vmatprep.subr.mxu0 0.0
    %1595 = vmatpush1.msra.mxu0 0.0
    %1596 = vmatprep.subr.mxu0 0.0
    %1597 = vmatpush1.msra.mxu0 0.0
    %1598 = vmatprep.subr.mxu0 0.0
    %1599 = vmatpush1.msra.mxu0 0.0
    %1600 = vmatprep.subr.mxu0 0.0
    %1601 = vmatpush1.msra.mxu0 0.0
    %1602 = vmatprep.subr.mxu0 0.0
    %1603 = vmatpush1.msra.mxu0 0.0
    %1604 = vmatprep.subr.mxu0 0.0
    %1605 = vmatpush1.msra.mxu0 0.0
    %1606 = vmatprep.subr.mxu0 0.0
    %1607 = vmatpush1.msra.mxu0 0.0
    %1608 = vmatprep.subr.mxu0 0.0
    %1609 = vmatpush1.msra.mxu0 0.0
    %1610 = vmatprep.subr.mxu0 0.0
    %1611 = vmatpush1.msra.mxu0 0.0
    %1612 = vmatprep.subr.mxu0 0.0
    %1613 = vmatpush1.msra.mxu0 0.0
    %1614 = vmatprep.subr.mxu0 0.0
    %1615 = vmatpush1.msra.mxu0 0.0
    %1616 = vmatprep.subr.mxu0 0.0
    %1617 = vmatpush1.msra.mxu0 0.0
    %1618 = vmatprep.subr.mxu0 0.0
    %1619 = vmatpush1.msra.mxu0 0.0
    %1620 = vmatprep.subr.mxu0 0.0
    %1621 = vmatpush1.msra.mxu0 0.0
    %1622 = vmatprep.subr.mxu0 0.0
    %1623 = vmatpush1.msra.mxu0 0.0
    %1624 = vmatprep.subr.mxu0 0.0
    %1625 = vmatpush1.msra.mxu0 0.0
    %1626 = vmatprep.subr.mxu0 0.0
    %1627 = vmatpush1.msra.mxu0 0.0
    %1628 = vmatprep.subr.mxu0 0.0
    %1629 = vmatpush1.msra.mxu0 0.0
    %1630 = vmatprep.subr.mxu0 0.0
    %1631 = vmatpush1.msra.mxu0 0.0
    %1632 = vmatprep.subr.mxu0 0.0
    %1633 = vmatpush1.msra.mxu0 0.0
    %1634 = vmatprep.mubr.f32.mxu0 0.0
    %1635 = vmatmul.mubr.f32.gmra.mrb[0].mxu0 %v1565
    %v1636 = vpop.f32.mrb[0].mxu0
    %v1637 = vadd.f32 0.0, %v1636
    %v1638 = vpop.f32.mrb[0].mxu0
    %1639 = vmatprep.mubr.f32.mxu0 0.0
    %1640 = vmatmul.mubr.f32.gmra.mrb[0].mxu0 %v1568
    %v1641 = vpop.f32.mrb[0].mxu0
    %v1642 = vadd.f32 0.0, %v1641
    %v1643 = vpop.f32.mrb[0].mxu0
    %1644 = vdwg.mxu0
    %v1645 = vadd.f32 %v45, %v1637
    %v1646 = vadd.f32 %v46, %v1642
    %v1647 = vld [vmem:[%s6] sm:$0x1]
    %v1649 = vlaneseq
    %v1650 = vshrl.u32 %v1649, 7
    %v1651 = vsub.s32 0, %v1650
    %v1652 = vrot.slane %v1647, %v1651
    %v1654 = vadd.f32 %v1645, %v1652
    %v1655 = vadd.f32 %v1646, %v1652
    %v1656 = vsel %vm47, %v1654, 0.0
    %1657 = vadd.xlane.f32.xlu0 %v1656
    %v1658 = vpop.xlane.xlu0 %1657
    %v1659 = vsel %vm47, %v1655, 0.0
    %1660 = vadd.xlane.f32.xlu0 %v1659
    %v1661 = vpop.xlane.xlu0 %1660
    %v1662 = vmul.f32 %v1658, %v54
    %v1663 = vmul.f32 %v1661, %v54
    %v1664 = vsub.f32 %v1654, %v1662
    %v1665 = vsub.f32 %v1655, %v1663
    %v1666 = vmul.f32 %v1664, %v1664
    %v1667 = vmul.f32 %v1665, %v1665
    %v1668 = vsel %vm47, %v1666, 0.0
    %1669 = vadd.xlane.f32.xlu0 %v1668
    %v1670 = vpop.xlane.xlu0 %1669
    %v1671 = vsel %vm47, %v1667, 0.0
    %1672 = vadd.xlane.f32.xlu0 %v1671
    %v1673 = vpop.xlane.xlu0 %1672
    %v1674 = vmul.f32 %v1670, %v54
    %v1675 = vmul.f32 %v1673, %v54
    %v1676 = vadd.f32 %v1674, 1e-05
    %v1677 = vadd.f32 %v1675, 1e-05
    %v1678 = vrsqrt.pop %v1676
    %v1679 = vrsqrt.pop %v1677
    %v1680 = vmul.f32 %v1664, %v1678
    %v1681 = vmul.f32 %v1665, %v1679
    %v1682 = vld [vmem:[%s7] sm:$0x1]
    %v1684 = vlaneseq
    %v1685 = vshrl.u32 %v1684, 7
    %v1686 = vsub.s32 0, %v1685
    %v1687 = vrot.slane %v1682, %v1686
    %v1689 = vmul.f32 %v1680, %v1687
    %v1690 = vmul.f32 %v1681, %v1687
    %v1691 = vld [vmem:[%s8] sm:$0x1]
    %v1693 = vlaneseq
    %v1694 = vshrl.u32 %v1693, 7
    %v1695 = vsub.s32 0, %v1694
    %v1696 = vrot.slane %v1691, %v1695
    %v1698 = vadd.f32 %v1689, %v1696
    %v1699 = vadd.f32 %v1690, %v1696
    %v1700 = vld [vmem:[%s9] sm:$0xff]
    %v1701 = vld [vmem:[%s9 + $0x8] sm:$0xff]
    %v1702 = vld [vmem:[%s9 + $0x10] sm:$0xff]
    %v1703 = vld [vmem:[%s9 + $0x18] sm:$0xff]
    %v1704 = vld [vmem:[%s9 + $0x20] sm:$0xff]
    %v1705 = vld [vmem:[%s9 + $0x28] sm:$0xff]
    %v1706 = vld [vmem:[%s9 + $0x30] sm:$0xff]
    %v1707 = vld [vmem:[%s9 + $0x38] sm:$0xff]
    %v1708 = vld [vmem:[%s9 + $0x40] sm:$0xff]
    %v1709 = vld [vmem:[%s9 + $0x48] sm:$0xff]
    %v1710 = vld [vmem:[%s9 + $0x50] sm:$0xff]
    %v1711 = vld [vmem:[%s9 + $0x58] sm:$0xff]
    %v1712 = vld [vmem:[%s9 + $0x60] sm:$0xff]
    %v1713 = vld [vmem:[%s9 + $0x68] sm:$0xff]
    %v1714 = vld [vmem:[%s9 + $0x70] sm:$0xff]
    %v1715 = vld [vmem:[%s9 + $0x78] sm:$0xff]
    %v1716 = vld [vmem:[%s10] sm:$0x3]
    %v1718 = vlaneseq
    %v1719 = vshrl.u32 %v1718, 7
    %v1720 = vsub.s32 0, %v1719
    %v1721 = vrot.slane %v1716, %v1720
    %v1722 = vlaneseq
    %v1723 = vshrl.u32 %v1722, 7
    %v1724 = vsub.s32 1, %v1723
    %v1725 = vrot.slane %v1716, %v1724
    %v1729 = vsel %vm47, %v1698, 0
    %v1732 = vsel %vm47, %v1699, 0
    %1734 = vmatprep.subr.mxu0 %v1701
    %1735 = vmatpush1.msra.mxu0 %v1700
    %1736 = vmatprep.subr.mxu0 %v1703
    %1737 = vmatpush1.msra.mxu0 %v1702
    %1738 = vmatprep.subr.mxu0 %v1705
    %1739 = vmatpush1.msra.mxu0 %v1704
    %1740 = vmatprep.subr.mxu0 %v1707
    %1741 = vmatpush1.msra.mxu0 %v1706
    %1742 = vmatprep.subr.mxu0 %v1709
    %1743 = vmatpush1.msra.mxu0 %v1708
    %1744 = vmatprep.subr.mxu0 %v1711
    %1745 = vmatpush1.msra.mxu0 %v1710
    %1746 = vmatprep.subr.mxu0 %v1713
    %1747 = vmatpush1.msra.mxu0 %v1712
    %1748 = vmatprep.subr.mxu0 %v1715
    %1749 = vmatpush1.msra.mxu0 %v1714
    %1750 = vmatprep.subr.mxu0 0.0
    %1751 = vmatpush1.msra.mxu0 0.0
    %1752 = vmatprep.subr.mxu0 0.0
    %1753 = vmatpush1.msra.mxu0 0.0
    %1754 = vmatprep.subr.mxu0 0.0
    %1755 = vmatpush1.msra.mxu0 0.0
    %1756 = vmatprep.subr.mxu0 0.0
    %1757 = vmatpush1.msra.mxu0 0.0
    %1758 = vmatprep.subr.mxu0 0.0
    %1759 = vmatpush1.msra.mxu0 0.0
    %1760 = vmatprep.subr.mxu0 0.0
    %1761 = vmatpush1.msra.mxu0 0.0
    %1762 = vmatprep.subr.mxu0 0.0
    %1763 = vmatpush1.msra.mxu0 0.0
    %1764 = vmatprep.subr.mxu0 0.0
    %1765 = vmatpush1.msra.mxu0 0.0
    %1766 = vmatprep.subr.mxu0 0.0
    %1767 = vmatpush1.msra.mxu0 0.0
    %1768 = vmatprep.subr.mxu0 0.0
    %1769 = vmatpush1.msra.mxu0 0.0
    %1770 = vmatprep.subr.mxu0 0.0
    %1771 = vmatpush1.msra.mxu0 0.0
    %1772 = vmatprep.subr.mxu0 0.0
    %1773 = vmatpush1.msra.mxu0 0.0
    %1774 = vmatprep.subr.mxu0 0.0
    %1775 = vmatpush1.msra.mxu0 0.0
    %1776 = vmatprep.subr.mxu0 0.0
    %1777 = vmatpush1.msra.mxu0 0.0
    %1778 = vmatprep.subr.mxu0 0.0
    %1779 = vmatpush1.msra.mxu0 0.0
    %1780 = vmatprep.subr.mxu0 0.0
    %1781 = vmatpush1.msra.mxu0 0.0
    %1782 = vmatprep.subr.mxu0 0.0
    %1783 = vmatpush1.msra.mxu0 0.0
    %1784 = vmatprep.subr.mxu0 0.0
    %1785 = vmatpush1.msra.mxu0 0.0
    %1786 = vmatprep.subr.mxu0 0.0
    %1787 = vmatpush1.msra.mxu0 0.0
    %1788 = vmatprep.subr.mxu0 0.0
    %1789 = vmatpush1.msra.mxu0 0.0
    %1790 = vmatprep.subr.mxu0 0.0
    %1791 = vmatpush1.msra.mxu0 0.0
    %1792 = vmatprep.subr.mxu0 0.0
    %1793 = vmatpush1.msra.mxu0 0.0
    %1794 = vmatprep.subr.mxu0 0.0
    %1795 = vmatpush1.msra.mxu0 0.0
    %1796 = vmatprep.subr.mxu0 0.0
    %1797 = vmatpush1.msra.mxu0 0.0
    %1798 = vmatprep.mubr.f32.mxu0 0.0
    %1799 = vmatmul.mubr.f32.gmra.mrb[0].mxu0 %v1729
    %v1800 = vpop.f32.mrb[0].mxu0
    %v1801 = vadd.f32 %v1721, %v1800
    %v1802 = vpop.f32.mrb[0].mxu0
    %v1803 = vadd.f32 %v1725, %v1802
    %1804 = vmatprep.mubr.f32.mxu0 0.0
    %1805 = vmatmul.mubr.f32.gmra.mrb[0].mxu0 %v1732
    %v1806 = vpop.f32.mrb[0].mxu0
    %v1807 = vadd.f32 %v1721, %v1806
    %v1808 = vpop.f32.mrb[0].mxu0
    %v1809 = vadd.f32 %v1725, %v1808
    %1810 = vdwg.mxu0
    %v1811 = vmul.f32 %v1801, -1.702
    %v1812 = vmul.f32 %v1803, -1.702
    %v1813 = vmul.f32 %v1807, -1.702
    %v1814 = vmul.f32 %v1809, -1.702
    %v1815 = vmul.f32 %v1811, 1.442695
    %v1816 = vpow.pop %v1815
    %v1817 = vmul.f32 %v1812, 1.442695
    %v1818 = vpow.pop %v1817
    %v1819 = vmul.f32 %v1813, 1.442695
    %v1820 = vpow.pop %v1819
    %v1821 = vmul.f32 %v1814, 1.442695
    %v1822 = vpow.pop %v1821
    %v1823 = vadd.f32 %v1816, 1.0
    %v1824 = vadd.f32 %v1818, 1.0
    %v1825 = vadd.f32 %v1820, 1.0
    %v1826 = vadd.f32 %v1822, 1.0
    %v1827 = vrcp.pop %v1823
    %v1828 = vmul.f32 1.0, %v1827
    %v1829 = vrcp.pop %v1824
    %v1830 = vmul.f32 1.0, %v1829
    %v1831 = vrcp.pop %v1825
    %v1832 = vmul.f32 1.0, %v1831
    %v1833 = vrcp.pop %v1826
    %v1834 = vmul.f32 1.0, %v1833
    %v1835 = vmul.f32 %v1801, %v1828
    %v1836 = vmul.f32 %v1803, %v1830
    %v1837 = vmul.f32 %v1807, %v1832
    %v1838 = vmul.f32 %v1809, %v1834
    %v1839 = vld [vmem:[%s11] sm:$0xff]
    %v1840 = vld [vmem:[%s11 + $0x8] sm:$0xff]
    %v1841 = vld [vmem:[%s11 + $0x10] sm:$0xff]
    %v1842 = vld [vmem:[%s11 + $0x18] sm:$0xff]
    %v1843 = vld [vmem:[%s11 + $0x20] sm:$0xff]
    %v1844 = vld [vmem:[%s11 + $0x28] sm:$0xff]
    %v1845 = vld [vmem:[%s11 + $0x30] sm:$0xff]
    %v1846 = vld [vmem:[%s11 + $0x38] sm:$0xff]
    %v1847 = vld [vmem:[%s11 + $0x40] sm:$0xff]
    %v1848 = vld [vmem:[%s11 + $0x48] sm:$0xff]
    %v1849 = vld [vmem:[%s11 + $0x50] sm:$0xff]
    %v1850 = vld [vmem:[%s11 + $0x58] sm:$0xff]
    %v1851 = vld [vmem:[%s11 + $0x60] sm:$0xff]
    %v1852 = vld [vmem:[%s11 + $0x68] sm:$0xff]
    %v1853 = vld [vmem:[%s11 + $0x70] sm:$0xff]
    %v1854 = vld [vmem:[%s11 + $0x78] sm:$0xff]
    %v1855 = vld [vmem:[%s11 + $0x80] sm:$0xff]
    %v1856 = vld [vmem:[%s11 + $0x88] sm:$0xff]
    %v1857 = vld [vmem:[%s11 + $0x90] sm:$0xff]
    %v1858 = vld [vmem:[%s11 + $0x98] sm:$0xff]
    %v1859 = vld [vmem:[%s11 + $0xa0] sm:$0xff]
    %v1860 = vld [vmem:[%s11 + $0xa8] sm:$0xff]
    %v1861 = vld [vmem:[%s11 + $0xb0] sm:$0xff]
    %v1862 = vld [vmem:[%s11 + $0xb8] sm:$0xff]
    %v1863 = vld [vmem:[%s11 + $0xc0] sm:$0xff]
    %v1864 = vld [vmem:[%s11 + $0xc8] sm:$0xff]
    %v1865 = vld [vmem:[%s11 + $0xd0] sm:$0xff]
    %v1866 = vld [vmem:[%s11 + $0xd8] sm:$0xff]
    %v1867 = vld [vmem:[%s11 + $0xe0] sm:$0xff]
    %v1868 = vld [vmem:[%s11 + $0xe8] sm:$0xff]
    %v1869 = vld [vmem:[%s11 + $0xf0] sm:$0xff]
    %v1870 = vld [vmem:[%s11 + $0xf8] sm:$0xff]
    %1871 = vmatprep.subr.mxu0 0.0
    %1872 = vmatpush1.msra.mxu0 %v1839
    %1873 = vmatprep.subr.mxu0 0.0
    %1874 = vmatpush1.msra.mxu0 %v1840
    %1875 = vmatprep.subr.mxu0 0.0
    %1876 = vmatpush1.msra.mxu0 %v1841
    %1877 = vmatprep.subr.mxu0 0.0
    %1878 = vmatpush1.msra.mxu0 %v1842
    %1879 = vmatprep.subr.mxu0 0.0
    %1880 = vmatpush1.msra.mxu0 %v1843
    %1881 = vmatprep.subr.mxu0 0.0
    %1882 = vmatpush1.msra.mxu0 %v1844
    %1883 = vmatprep.subr.mxu0 0.0
    %1884 = vmatpush1.msra.mxu0 %v1845
    %1885 = vmatprep.subr.mxu0 0.0
    %1886 = vmatpush1.msra.mxu0 %v1846
    %1887 = vmatprep.subr.mxu0 0.0
    %1888 = vmatpush1.msra.mxu0 %v1847
    %1889 = vmatprep.subr.mxu0 0.0
    %1890 = vmatpush1.msra.mxu0 %v1848
    %1891 = vmatprep.subr.mxu0 0.0
    %1892 = vmatpush1.msra.mxu0 %v1849
    %1893 = vmatprep.subr.mxu0 0.0
    %1894 = vmatpush1.msra.mxu0 %v1850
    %1895 = vmatprep.subr.mxu0 0.0
    %1896 = vmatpush1.msra.mxu0 %v1851
    %1897 = vmatprep.subr.mxu0 0.0
    %1898 = vmatpush1.msra.mxu0 %v1852
    %1899 = vmatprep.subr.mxu0 0.0
    %1900 = vmatpush1.msra.mxu0 %v1853
    %1901 = vmatprep.subr.mxu0 0.0
    %1902 = vmatpush1.msra.mxu0 %v1854
    %1903 = vmatprep.subr.mxu0 0.0
    %1904 = vmatpush1.msra.mxu0 %v1855
    %1905 = vmatprep.subr.mxu0 0.0
    %1906 = vmatpush1.msra.mxu0 %v1856
    %1907 = vmatprep.subr.mxu0 0.0
    %1908 = vmatpush1.msra.mxu0 %v1857
    %1909 = vmatprep.subr.mxu0 0.0
    %1910 = vmatpush1.msra.mxu0 %v1858
    %1911 = vmatprep.subr.mxu0 0.0
    %1912 = vmatpush1.msra.mxu0 %v1859
    %1913 = vmatprep.subr.mxu0 0.0
    %1914 = vmatpush1.msra.mxu0 %v1860
    %1915 = vmatprep.subr.mxu0 0.0
    %1916 = vmatpush1.msra.mxu0 %v1861
    %1917 = vmatprep.subr.mxu0 0.0
    %1918 = vmatpush1.msra.mxu0 %v1862
    %1919 = vmatprep.subr.mxu0 0.0
    %1920 = vmatpush1.msra.mxu0 %v1863
    %1921 = vmatprep.subr.mxu0 0.0
    %1922 = vmatpush1.msra.mxu0 %v1864
    %1923 = vmatprep.subr.mxu0 0.0
    %1924 = vmatpush1.msra.mxu0 %v1865
    %1925 = vmatprep.subr.mxu0 0.0
    %1926 = vmatpush1.msra.mxu0 %v1866
    %1927 = vmatprep.subr.mxu0 0.0
    %1928 = vmatpush1.msra.mxu0 %v1867
    %1929 = vmatprep.subr.mxu0 0.0
    %1930 = vmatpush1.msra.mxu0 %v1868
    %1931 = vmatprep.subr.mxu0 0.0
    %1932 = vmatpush1.msra.mxu0 %v1869
    %1933 = vmatprep.subr.mxu0 0.0
    %1934 = vmatpush1.msra.mxu0 %v1870
    %1935 = vmatprep.mubr.f32.mxu0 %v1836
    %1936 = vmatmul.mubr.f32.gmra.mrb[0].mxu0 %v1835
    %v1937 = vpop.f32.mrb[0].mxu0
    %v1938 = vadd.f32 0.0, %v1937
    %v1939 = vpop.f32.mrb[0].mxu0
    %1940 = vmatprep.mubr.f32.mxu0 %v1838
    %1941 = vmatmul.mubr.f32.gmra.mrb[0].mxu0 %v1837
    %v1942 = vpop.f32.mrb[0].mxu0
    %v1943 = vadd.f32 0.0, %v1942
    %v1944 = vpop.f32.mrb[0].mxu0
    %1945 = vdwg.mxu0
    %v1946 = vadd.f32 %v1654, %v1938
    %v1947 = vadd.f32 %v1655, %v1943
    %v1948 = vld [vmem:[%s12] sm:$0x1]
    %v1950 = vlaneseq
    %v1951 = vshrl.u32 %v1950, 7
    %v1952 = vsub.s32 0, %v1951
    %v1953 = vrot.slane %v1948, %v1952
    %v1955 = vadd.f32 %v1946, %v1953
    %v1956 = vadd.f32 %v1947, %v1953
    %1957 = vst.msk [vmem:[#allocation2] sm:$0xff] %vm47, %v1955
    %1958 = vst.msk [vmem:[#allocation2 + $0x8] sm:$0xff] %vm47, %v1956
    // Predicated region
    $region54: #{tpu_custom_call.1} parent=1 // pred_check
      _
    $region55: #{tpu_custom_call.1} parent=1 // pred_check_branch
      %1960 = sbr.rel (0) target = $region57
    $region56: #{tpu_custom_call.1} parent=1 // pred_region
      %s1962 = ssub.s32 256, 256
      %1963 = vsyncadd [#allocation3], %s1962
      %s1964 = sshll.u32 [#allocation2], 4
      %s1965 = int_to_ptr.vmem [resolvable:$true] %s1964
      %1970 = dma.vmem_to_hbm [thread:$0]  %s1965, 256, %s13, [#allocation3], 128, 128, 8
    $region57: #{tpu_custom_call.1} parent=1 // pred_fallthru
      _
    // Predicated region
    $region58: #{tpu_custom_call.1} parent=1 // pred_check
      _
    $region59: #{tpu_custom_call.1} parent=1 // pred_check_branch
      %1972 = sbr.rel (0) target = $region61
    $region60: #{tpu_custom_call.1} parent=1 // pred_region
      %1973 = dma.done [#allocation3], 256
    $region61: #{tpu_custom_call.1} parent=1 // pred_fallthru
      _
    %1974 = vsyncpa [#allocation3], 1

</llo_original>
